<compile_context>
chip_gen: v7x
topology: tpu7x:2x2x1
jax: 0.10.0
libtpu: 0.0.40
codegen_flags: <defaults>
</compile_context>

<pallas_src>
import jax
import jax.numpy as jnp
from jax.experimental import pallas as pl
from jax.experimental.pallas import tpu as pltpu

IN_FEATURES = 32 * 32 * 3   # 3072
OUT_FEATURES = 100
N_PAD = 128                 # lane-dense output / weight column padding
MAX_BATCH_TILE = 512        # ~85% of HBM roofline; 6 MiB f32 x per buffer


def linear_kernel(x_ref, w_ref, b_ref, o_ref):
    """o = x @ w + b for one (tm, K) f32 x-block against the resident (K, N_PAD)
    bf16 weight. Cast to bf16 happens in-kernel (saves a full HBM pass on x)."""
    x_bf = x_ref[...].astype(jnp.bfloat16)
    acc = jnp.dot(x_bf, w_ref[...], preferred_element_type=jnp.float32)
    o_ref[...] = acc + b_ref[...]


def prepare_params(weight, bias):
    """One-time parameter prep (hoisted out of the forward path).

    weight: (100, 3072) f32  ->  (3072, 128) bf16, transposed + zero-padded cols
    bias:   (100,)      f32  ->  (1, 128)    f32,  zero-padded
    """
    w_t = jnp.transpose(weight).astype(jnp.bfloat16)             # (K, 100)
    w_pad = jnp.zeros((IN_FEATURES, N_PAD), jnp.bfloat16)
    w_pad = w_pad.at[:, :OUT_FEATURES].set(w_t)
    b_pad = jnp.zeros((1, N_PAD), jnp.float32)
    b_pad = b_pad.at[0, :OUT_FEATURES].set(bias.astype(jnp.float32))
    return w_pad, b_pad


def _round_up(n, m):
    return ((n + m - 1) // m) * m


def _plan_batch(B, max_tile=MAX_BATCH_TILE):
    """Pick (tile, padded_B, grid_len). Tiles are multiples of 16 rows; the
    batch is padded up to a multiple of the tile (no exact-divisor fallback).
    For moderate batches the grid is split into >= 2 steps so the parallel
    axis can actually shard across v7x's two TensorCores."""
    b16 = _round_up(B, 16)
    if b16 <= 16:
        tm = 16                                # tiny batch: one 16-row block
    elif b16 <= max_tile:
        tm = _round_up(pl.cdiv(b16, 2), 16)    # >= 2 grid steps when possible
    else:
        tm = max_tile
    b_pad = _round_up(b16, tm)
    return tm, b_pad, b_pad // tm


def logistic_regression_forward(x, w_pad, b_pad):
    """x: (B, 3, 32, 32) float32; w_pad: (3072, 128) bf16; b_pad: (1, 128) f32."""
    B = x.shape[0]
    x_flat = x.reshape(B, -1)                  # row-major, same as torch .view; stays f32
    K = x_flat.shape[1]
    assert K == IN_FEATURES

    tm, b_pad_rows, grid_len = _plan_batch(B)
    if b_pad_rows != B:
        x_flat = jnp.pad(x_flat, ((0, b_pad_rows - B), (0, 0)))

    cost = pl.CostEstimate(
        flops=2 * b_pad_rows * K * N_PAD,
        transcendentals=0,
        bytes_accessed=b_pad_rows * K * 4 + K * N_PAD * 2 + b_pad_rows * N_PAD * 4,
    )

    out = pl.pallas_call(
        linear_kernel,
        out_shape=jax.ShapeDtypeStruct((b_pad_rows, N_PAD), jnp.float32),
        grid=(grid_len,),
        in_specs=[
            pl.BlockSpec((tm, K), lambda i: (i, 0)),       # x block (full K), f32
            pl.BlockSpec((K, N_PAD), lambda i: (0, 0)),    # full bf16 weight, resident
            pl.BlockSpec((1, N_PAD), lambda i: (0, 0)),    # bias, resident
        ],
        out_specs=pl.BlockSpec((tm, N_PAD), lambda i: (i, 0)),
        compiler_params=pltpu.CompilerParams(
            dimension_semantics=("parallel",),             # batch axis (megacore/v7x)
            vmem_limit_bytes=32 * 1024 * 1024,             # clears v5e's 16 MiB default
        ),
        cost_estimate=cost,
    )(x_flat, w_pad, b_pad)

    return out[:B, :OUT_FEATURES]                          # (B, 100)


def init_params(key):
    """Deterministic init mimicking nn.Linear default (U(-1/sqrt(fan_in), +1/sqrt(fan_in)))."""
    kw, kb = jax.random.split(key)
    bound = 1.0 / jnp.sqrt(jnp.float32(IN_FEATURES))
    weight = jax.random.uniform(
        kw, (OUT_FEATURES, IN_FEATURES), jnp.float32, -bound, bound
    )
    bias = jax.random.uniform(kb, (OUT_FEATURES,), jnp.float32, -bound, bound)
    return weight, bias


if __name__ == "__main__":
    key = jax.random.PRNGKey(0)
    k_x, k_p = jax.random.split(key)

    B = 2
    x = jax.random.normal(k_x, (B, 3, 32, 32), jnp.float32)   # NCHW, like CIFAR-10
    weight, bias = init_params(k_p)

    # One-time parameter prep (outside the forward path).
    w_pad, b_pad = prepare_params(weight, bias)

    y = logistic_regression_forward(x, w_pad, b_pad)
    y = jax.block_until_ready(y)
    assert y.shape == (B, OUT_FEATURES)

    # Strict check against a reference using the same bf16 rounding of x and w.
    x_bf = x.reshape(B, -1).astype(jnp.bfloat16).astype(jnp.float32)
    w_bf = w_pad[:, :OUT_FEATURES].astype(jnp.float32)
    y_ref_bf16 = x_bf @ w_bf + bias
    assert jnp.allclose(y, y_ref_bf16, atol=2e-3, rtol=2e-3)

    # Loose check against the full-precision PyTorch-equivalent reference.
    y_ref_f32 = x.reshape(B, -1) @ weight.T + bias
    assert jnp.allclose(y, y_ref_f32, atol=5e-2, rtol=5e-2)

    print("KERNEL_OK")
</pallas_src>

<mosaic_0001>
module attributes {stable_mosaic.version = 11 : i64} {
  func.func @linear_kernel(%arg0: i32, %arg1: memref<16x3072xf32, #tpu.memory_space<vmem>>, %arg2: memref<3072x128xbf16, #tpu.memory_space<vmem>>, %arg3: memref<1x128xf32, #tpu.memory_space<vmem>>, %arg4: memref<16x128xf32, #tpu.memory_space<vmem>>) attributes {dimension_semantics = [#tpu.dimension_semantics<parallel>], iteration_bounds = array<i64: 1>, scalar_prefetch = 0 : i64, scratch_operands = 0 : i64, tpu.core_type = #tpu.core_type<tc>, window_params = [{transform_indices = @transform_0, window_bounds = array<i64: 16, 3072>}, {pipeline_mode = #tpu.pipeline_mode<synchronous>, transform_indices = @transform_1, window_bounds = array<i64: 3072, 128>}, {pipeline_mode = #tpu.pipeline_mode<synchronous>, transform_indices = @transform_2, window_bounds = array<i64: 1, 128>}, {transform_indices = @transform_3, window_bounds = array<i64: 16, 128>}]} {
    %c0 = arith.constant 0 : index
    %c0_0 = arith.constant 0 : index
    %0 = vector.load %arg1[%c0, %c0_0] : memref<16x3072xf32, #tpu.memory_space<vmem>>, vector<16x3072xf32>
    %1 = arith.truncf %0 : vector<16x3072xf32> to vector<16x3072xbf16>
    %c0_1 = arith.constant 0 : index
    %c0_2 = arith.constant 0 : index
    %2 = vector.load %arg2[%c0_1, %c0_2] : memref<3072x128xbf16, #tpu.memory_space<vmem>>, vector<3072x128xbf16>
    %cst = arith.constant dense<0.000000e+00> : vector<16x128xf32>
    %3 = tpu.matmul %1, %2, %cst {dimension_numbers = #tpu.dot_dimension_numbers<[1], [0], [0], [1], [0, 0, 1, 1], [], []>} : vector<16x3072xbf16>, vector<3072x128xbf16>, vector<16x128xf32> -> vector<16x128xf32>
    %c0_3 = arith.constant 0 : index
    %c0_4 = arith.constant 0 : index
    %4 = vector.load %arg3[%c0_3, %c0_4] : memref<1x128xf32, #tpu.memory_space<vmem>>, vector<1x128xf32>
    %5 = vector.broadcast %4 : vector<1x128xf32> to vector<16x128xf32>
    %6 = arith.addf %3, %5 : vector<16x128xf32>
    %c0_5 = arith.constant 0 : index
    %c0_6 = arith.constant 0 : index
    %7 = vector.load %arg4[%c0_5, %c0_6] : memref<16x128xf32, #tpu.memory_space<vmem>>, vector<16x128xf32>
    tpu.vector_store %arg4[%c0_5, %c0_6], %6 {strides = array<i32>} : memref<16x128xf32, #tpu.memory_space<vmem>>, vector<16x128xf32>,
    return
  }
  func.func @transform_0(%arg0: i32) -> (i32, i32) {
    %c0_i32 = arith.constant 0 : i32
    %c0_i32_0 = arith.constant 0 : i32
    return %arg0, %c0_i32 : i32, i32
  }
  func.func @transform_1(%arg0: i32) -> (i32, i32) {
    %c0_i32 = arith.constant 0 : i32
    %c0_i32_0 = arith.constant 0 : i32
    %c0_i32_1 = arith.constant 0 : i32
    return %c0_i32, %c0_i32_0 : i32, i32
  }
  func.func @transform_2(%arg0: i32) -> (i32, i32) {
    %c0_i32 = arith.constant 0 : i32
    %c0_i32_0 = arith.constant 0 : i32
    %c0_i32_1 = arith.constant 0 : i32
    return %c0_i32, %c0_i32_0 : i32, i32
  }
  func.func @transform_3(%arg0: i32) -> (i32, i32) {
    %c0_i32 = arith.constant 0 : i32
    %c0_i32_0 = arith.constant 0 : i32
    return %arg0, %c0_i32 : i32, i32
  }
}

</mosaic_0001>

<llo_original>
// kernel: tpu_custom_call.1
$region0: #{tpu_custom_call.1}
  #allocation0 [shape = 'u32[]', space=smem, size = 0x4, offset = 0x4, fixed_abs, tag = 'smem constant byte address 0x4 - core index']
  #allocation1 [shape = 'u32[144,128]{1,0:T(1,128)}', space=vmem, size = 0x12000, scoped, tag = 'internal scratch']
  %s0 = inlined_call_operand.hbm [shape: f32[16,3072], index: 0, kind: input, shape index: {}]
  %s1 = inlined_call_operand.hbm [shape: bf16[3072,128], index: 1, kind: input, shape index: {}]
  %s2 = inlined_call_operand.vmem [shape: f32[1,128], index: 2, kind: input, shape index: {}]
  %s3 = inlined_call_operand.hbm [shape: f32[16,128], index: 3, kind: output, shape index: {}]
  %s4 = sld [smem:[#allocation0]]
  $region30: #{tpu_custom_call.1} parent=0
    _
  %s6 = ssub.s32 1, %s4
  %s7 = scalar_select 0, %s6, %s4
  $region1: #{tpu_custom_call.1} parent=0
    #allocation2 [shape = 'u8[196608]{0}', space=vmem, size = 0x30000, scoped, tag = 'input window, operand 0, single buffered']
    #allocation3 [shape = 's32[1]{0}', space=sflag, size = 0x4, scoped, tag = 'scoped memory for tpu_custom_call.1']
    #allocation4 [shape = 's32[1]{0}', space=sflag, size = 0x4, scoped, tag = 'scoped memory for tpu_custom_call.1']
    #allocation5 [shape = 'u8[786432]{0}', space=vmem, size = 0xc0000, scoped, tag = 'input window, operand 1, single buffered']
    #allocation6 [shape = 's32[1]{0}', space=sflag, size = 0x4, scoped, tag = 'scoped memory for tpu_custom_call.1']
    #allocation7 [shape = 'u8[8192]{0}', space=vmem, size = 0x2000, scoped, tag = 'output window, operand 0, single buffered']
    %8 = vsyncpa [#allocation3], 0
    %9 = vsyncpa [#allocation6], 0
    %10 = vsyncpa [#allocation4], 0
    // Predicated region
    $region2: #{tpu_custom_call.1} parent=1 // pred_check
      _
    $region3: #{tpu_custom_call.1} parent=1 // pred_check_branch
      %12 = sbr.rel (0) target = $region5
    $region4: #{tpu_custom_call.1} parent=1 // pred_region
      %s14 = ssub.s32 6144, 6144
      %15 = vsyncadd [#allocation3], %s14
      %s16 = sshll.u32 [#allocation2], 4
      %s17 = int_to_ptr.vmem [resolvable:$true] %s16
      %22 = dma.hbm_to_vmem [thread:$0]  %s0, 6144, %s17, [#allocation3], 3072, 3072, 192
    $region5: #{tpu_custom_call.1} parent=1 // pred_fallthru
      _
    // Predicated region
    $region6: #{tpu_custom_call.1} parent=1 // pred_check
      _
    $region7: #{tpu_custom_call.1} parent=1 // pred_check_branch
      %24 = sbr.rel (0) target = $region9
    $region8: #{tpu_custom_call.1} parent=1 // pred_region
      %s26 = ssub.s32 24576, 24576
      %27 = vsyncadd [#allocation6], %s26
      %s28 = sshll.u32 [#allocation5], 4
      %s29 = int_to_ptr.vmem [resolvable:$true] %s28
      %34 = dma.hbm_to_vmem [thread:$0]  %s1, 24576, %s29, [#allocation6], 64, 64, 4
    $region9: #{tpu_custom_call.1} parent=1 // pred_fallthru
      _
    // Predicated region
    $region10: #{tpu_custom_call.1} parent=1 // pred_check
      _
    $region11: #{tpu_custom_call.1} parent=1 // pred_check_branch
      %36 = sbr.rel (0) target = $region13
    $region12: #{tpu_custom_call.1} parent=1 // pred_region
      _
    $region13: #{tpu_custom_call.1} parent=1 // pred_fallthru
      _
    // Predicated region
    $region14: #{tpu_custom_call.1} parent=1 // pred_check
      _
    $region15: #{tpu_custom_call.1} parent=1 // pred_check_branch
      %38 = sbr.rel (0) target = $region17
    $region16: #{tpu_custom_call.1} parent=1 // pred_region
      %39 = dma.done [#allocation3], 6144
    $region17: #{tpu_custom_call.1} parent=1 // pred_fallthru
      _
    // Predicated region
    $region18: #{tpu_custom_call.1} parent=1 // pred_check
      _
    $region19: #{tpu_custom_call.1} parent=1 // pred_check_branch
      %41 = sbr.rel (0) target = $region21
    $region20: #{tpu_custom_call.1} parent=1 // pred_region
      %42 = dma.done [#allocation6], 24576
    $region21: #{tpu_custom_call.1} parent=1 // pred_fallthru
      _
    %v44 = vld [vmem:[#allocation2] sm:$0xff]
    %v45 = vld [vmem:[#allocation2 + $0x8] sm:$0xff]
    %v46 = vld [vmem:[#allocation2 + $0x10] sm:$0xff]
    %v47 = vld [vmem:[#allocation2 + $0x18] sm:$0xff]
    %v48 = vld [vmem:[#allocation2 + $0x20] sm:$0xff]
    %v49 = vld [vmem:[#allocation2 + $0x28] sm:$0xff]
    %v50 = vld [vmem:[#allocation2 + $0x30] sm:$0xff]
    %v51 = vld [vmem:[#allocation2 + $0x38] sm:$0xff]
    %v52 = vld [vmem:[#allocation2 + $0x40] sm:$0xff]
    %v53 = vld [vmem:[#allocation2 + $0x48] sm:$0xff]
    %v54 = vld [vmem:[#allocation2 + $0x50] sm:$0xff]
    %v55 = vld [vmem:[#allocation2 + $0x58] sm:$0xff]
    %v56 = vld [vmem:[#allocation2 + $0x60] sm:$0xff]
    %v57 = vld [vmem:[#allocation2 + $0x68] sm:$0xff]
    %v58 = vld [vmem:[#allocation2 + $0x70] sm:$0xff]
    %v59 = vld [vmem:[#allocation2 + $0x78] sm:$0xff]
    %v60 = vld [vmem:[#allocation2 + $0x80] sm:$0xff]
    %v61 = vld [vmem:[#allocation2 + $0x88] sm:$0xff]
    %v62 = vld [vmem:[#allocation2 + $0x90] sm:$0xff]
    %v63 = vld [vmem:[#allocation2 + $0x98] sm:$0xff]
    %v64 = vld [vmem:[#allocation2 + $0xa0] sm:$0xff]
    %v65 = vld [vmem:[#allocation2 + $0xa8] sm:$0xff]
    %v66 = vld [vmem:[#allocation2 + $0xb0] sm:$0xff]
    %v67 = vld [vmem:[#allocation2 + $0xb8] sm:$0xff]
    %v68 = vld [vmem:[#allocation2 + $0xc0] sm:$0xff]
    %v69 = vld [vmem:[#allocation2 + $0xc8] sm:$0xff]
    %v70 = vld [vmem:[#allocation2 + $0xd0] sm:$0xff]
    %v71 = vld [vmem:[#allocation2 + $0xd8] sm:$0xff]
    %v72 = vld [vmem:[#allocation2 + $0xe0] sm:$0xff]
    %v73 = vld [vmem:[#allocation2 + $0xe8] sm:$0xff]
    %v74 = vld [vmem:[#allocation2 + $0xf0] sm:$0xff]
    %v75 = vld [vmem:[#allocation2 + $0xf8] sm:$0xff]
    %v76 = vld [vmem:[#allocation2 + $0x100] sm:$0xff]
    %v77 = vld [vmem:[#allocation2 + $0x108] sm:$0xff]
    %v78 = vld [vmem:[#allocation2 + $0x110] sm:$0xff]
    %v79 = vld [vmem:[#allocation2 + $0x118] sm:$0xff]
    %v80 = vld [vmem:[#allocation2 + $0x120] sm:$0xff]
    %v81 = vld [vmem:[#allocation2 + $0x128] sm:$0xff]
    %v82 = vld [vmem:[#allocation2 + $0x130] sm:$0xff]
    %v83 = vld [vmem:[#allocation2 + $0x138] sm:$0xff]
    %v84 = vld [vmem:[#allocation2 + $0x140] sm:$0xff]
    %v85 = vld [vmem:[#allocation2 + $0x148] sm:$0xff]
    %v86 = vld [vmem:[#allocation2 + $0x150] sm:$0xff]
    %v87 = vld [vmem:[#allocation2 + $0x158] sm:$0xff]
    %v88 = vld [vmem:[#allocation2 + $0x160] sm:$0xff]
    %v89 = vld [vmem:[#allocation2 + $0x168] sm:$0xff]
    %v90 = vld [vmem:[#allocation2 + $0x170] sm:$0xff]
    %v91 = vld [vmem:[#allocation2 + $0x178] sm:$0xff]
    %v92 = vpack.c.bf16 %v68, %v44
    %v93 = vpack.c.bf16 %v69, %v45
    %v94 = vpack.c.bf16 %v70, %v46
    %v95 = vpack.c.bf16 %v71, %v47
    %v96 = vpack.c.bf16 %v72, %v48
    %v97 = vpack.c.bf16 %v73, %v49
    %v98 = vpack.c.bf16 %v74, %v50
    %v99 = vpack.c.bf16 %v75, %v51
    %v100 = vpack.c.bf16 %v76, %v52
    %v101 = vpack.c.bf16 %v77, %v53
    %v102 = vpack.c.bf16 %v78, %v54
    %v103 = vpack.c.bf16 %v79, %v55
    %v104 = vpack.c.bf16 %v80, %v56
    %v105 = vpack.c.bf16 %v81, %v57
    %v106 = vpack.c.bf16 %v82, %v58
    %v107 = vpack.c.bf16 %v83, %v59
    %v108 = vpack.c.bf16 %v84, %v60
    %v109 = vpack.c.bf16 %v85, %v61
    %v110 = vpack.c.bf16 %v86, %v62
    %v111 = vpack.c.bf16 %v87, %v63
    %v112 = vpack.c.bf16 %v88, %v64
    %v113 = vpack.c.bf16 %v89, %v65
    %v114 = vpack.c.bf16 %v90, %v66
    %v115 = vpack.c.bf16 %v91, %v67
    %v116 = vld [vmem:[#allocation5] sm:$0xf]
    %v117 = vld [vmem:[#allocation5 + $0x4] sm:$0xf]
    %v118 = vld [vmem:[#allocation5 + $0x8] sm:$0xf]
    %v119 = vld [vmem:[#allocation5 + $0xc] sm:$0xf]
    %v120 = vld [vmem:[#allocation5 + $0x10] sm:$0xf]
    %v121 = vld [vmem:[#allocation5 + $0x14] sm:$0xf]
    %v122 = vld [vmem:[#allocation5 + $0x18] sm:$0xf]
    %v123 = vld [vmem:[#allocation5 + $0x1c] sm:$0xf]
    %v124 = vld [vmem:[#allocation5 + $0x20] sm:$0xf]
    %v125 = vld [vmem:[#allocation5 + $0x24] sm:$0xf]
    %v126 = vld [vmem:[#allocation5 + $0x28] sm:$0xf]
    %v127 = vld [vmem:[#allocation5 + $0x2c] sm:$0xf]
    %v128 = vld [vmem:[#allocation5 + $0x30] sm:$0xf]
    %v129 = vld [vmem:[#allocation5 + $0x34] sm:$0xf]
    %v130 = vld [vmem:[#allocation5 + $0x38] sm:$0xf]
    %v131 = vld [vmem:[#allocation5 + $0x3c] sm:$0xf]
    %v132 = vld [vmem:[#allocation5 + $0x40] sm:$0xf]
    %v133 = vld [vmem:[#allocation5 + $0x44] sm:$0xf]
    %v134 = vld [vmem:[#allocation5 + $0x48] sm:$0xf]
    %v135 = vld [vmem:[#allocation5 + $0x4c] sm:$0xf]
    %v136 = vld [vmem:[#allocation5 + $0x50] sm:$0xf]
    %v137 = vld [vmem:[#allocation5 + $0x54] sm:$0xf]
    %v138 = vld [vmem:[#allocation5 + $0x58] sm:$0xf]
    %v139 = vld [vmem:[#allocation5 + $0x5c] sm:$0xf]
    %v140 = vld [vmem:[#allocation5 + $0x60] sm:$0xf]
    %v141 = vld [vmem:[#allocation5 + $0x64] sm:$0xf]
    %v142 = vld [vmem:[#allocation5 + $0x68] sm:$0xf]
    %v143 = vld [vmem:[#allocation5 + $0x6c] sm:$0xf]
    %v144 = vld [vmem:[#allocation5 + $0x70] sm:$0xf]
    %v145 = vld [vmem:[#allocation5 + $0x74] sm:$0xf]
    %v146 = vld [vmem:[#allocation5 + $0x78] sm:$0xf]
    %v147 = vld [vmem:[#allocation5 + $0x7c] sm:$0xf]
    %v148 = vld [vmem:[#allocation5 + $0x80] sm:$0xf]
    %v149 = vld [vmem:[#allocation5 + $0x84] sm:$0xf]
    %v150 = vld [vmem:[#allocation5 + $0x88] sm:$0xf]
    %v151 = vld [vmem:[#allocation5 + $0x8c] sm:$0xf]
    %v152 = vld [vmem:[#allocation5 + $0x90] sm:$0xf]
    %v153 = vld [vmem:[#allocation5 + $0x94] sm:$0xf]
    %v154 = vld [vmem:[#allocation5 + $0x98] sm:$0xf]
    %v155 = vld [vmem:[#allocation5 + $0x9c] sm:$0xf]
    %v156 = vld [vmem:[#allocation5 + $0xa0] sm:$0xf]
    %v157 = vld [vmem:[#allocation5 + $0xa4] sm:$0xf]
    %v158 = vld [vmem:[#allocation5 + $0xa8] sm:$0xf]
    %v159 = vld [vmem:[#allocation5 + $0xac] sm:$0xf]
    %v160 = vld [vmem:[#allocation5 + $0xb0] sm:$0xf]
    %v161 = vld [vmem:[#allocation5 + $0xb4] sm:$0xf]
    %v162 = vld [vmem:[#allocation5 + $0xb8] sm:$0xf]
    %v163 = vld [vmem:[#allocation5 + $0xbc] sm:$0xf]
    %v164 = vld [vmem:[#allocation5 + $0xc0] sm:$0xf]
    %v165 = vld [vmem:[#allocation5 + $0xc4] sm:$0xf]
    %v166 = vld [vmem:[#allocation5 + $0xc8] sm:$0xf]
    %v167 = vld [vmem:[#allocation5 + $0xcc] sm:$0xf]
    %v168 = vld [vmem:[#allocation5 + $0xd0] sm:$0xf]
    %v169 = vld [vmem:[#allocation5 + $0xd4] sm:$0xf]
    %v170 = vld [vmem:[#allocation5 + $0xd8] sm:$0xf]
    %v171 = vld [vmem:[#allocation5 + $0xdc] sm:$0xf]
    %v172 = vld [vmem:[#allocation5 + $0xe0] sm:$0xf]
    %v173 = vld [vmem:[#allocation5 + $0xe4] sm:$0xf]
    %v174 = vld [vmem:[#allocation5 + $0xe8] sm:$0xf]
    %v175 = vld [vmem:[#allocation5 + $0xec] sm:$0xf]
    %v176 = vld [vmem:[#allocation5 + $0xf0] sm:$0xf]
    %v177 = vld [vmem:[#allocation5 + $0xf4] sm:$0xf]
    %v178 = vld [vmem:[#allocation5 + $0xf8] sm:$0xf]
    %v179 = vld [vmem:[#allocation5 + $0xfc] sm:$0xf]
    %v180 = vld [vmem:[#allocation5 + $0x100] sm:$0xf]
    %v181 = vld [vmem:[#allocation5 + $0x104] sm:$0xf]
    %v182 = vld [vmem:[#allocation5 + $0x108] sm:$0xf]
    %v183 = vld [vmem:[#allocation5 + $0x10c] sm:$0xf]
    %v184 = vld [vmem:[#allocation5 + $0x110] sm:$0xf]
    %v185 = vld [vmem:[#allocation5 + $0x114] sm:$0xf]
    %v186 = vld [vmem:[#allocation5 + $0x118] sm:$0xf]
    %v187 = vld [vmem:[#allocation5 + $0x11c] sm:$0xf]
    %v188 = vld [vmem:[#allocation5 + $0x120] sm:$0xf]
    %v189 = vld [vmem:[#allocation5 + $0x124] sm:$0xf]
    %v190 = vld [vmem:[#allocation5 + $0x128] sm:$0xf]
    %v191 = vld [vmem:[#allocation5 + $0x12c] sm:$0xf]
    %v192 = vld [vmem:[#allocation5 + $0x130] sm:$0xf]
    %v193 = vld [vmem:[#allocation5 + $0x134] sm:$0xf]
    %v194 = vld [vmem:[#allocation5 + $0x138] sm:$0xf]
    %v195 = vld [vmem:[#allocation5 + $0x13c] sm:$0xf]
    %v196 = vld [vmem:[#allocation5 + $0x140] sm:$0xf]
    %v197 = vld [vmem:[#allocation5 + $0x144] sm:$0xf]
    %v198 = vld [vmem:[#allocation5 + $0x148] sm:$0xf]
    %v199 = vld [vmem:[#allocation5 + $0x14c] sm:$0xf]
    %v200 = vld [vmem:[#allocation5 + $0x150] sm:$0xf]
    %v201 = vld [vmem:[#allocation5 + $0x154] sm:$0xf]
    %v202 = vld [vmem:[#allocation5 + $0x158] sm:$0xf]
    %v203 = vld [vmem:[#allocation5 + $0x15c] sm:$0xf]
    %v204 = vld [vmem:[#allocation5 + $0x160] sm:$0xf]
    %v205 = vld [vmem:[#allocation5 + $0x164] sm:$0xf]
    %v206 = vld [vmem:[#allocation5 + $0x168] sm:$0xf]
    %v207 = vld [vmem:[#allocation5 + $0x16c] sm:$0xf]
    %v208 = vld [vmem:[#allocation5 + $0x170] sm:$0xf]
    %v209 = vld [vmem:[#allocation5 + $0x174] sm:$0xf]
    %v210 = vld [vmem:[#allocation5 + $0x178] sm:$0xf]
    %v211 = vld [vmem:[#allocation5 + $0x17c] sm:$0xf]
    %v212 = vld [vmem:[#allocation5 + $0x180] sm:$0xf]
    %v213 = vld [vmem:[#allocation5 + $0x184] sm:$0xf]
    %v214 = vld [vmem:[#allocation5 + $0x188] sm:$0xf]
    %v215 = vld [vmem:[#allocation5 + $0x18c] sm:$0xf]
    %v216 = vld [vmem:[#allocation5 + $0x190] sm:$0xf]
    %v217 = vld [vmem:[#allocation5 + $0x194] sm:$0xf]
    %v218 = vld [vmem:[#allocation5 + $0x198] sm:$0xf]
    %v219 = vld [vmem:[#allocation5 + $0x19c] sm:$0xf]
    %v220 = vld [vmem:[#allocation5 + $0x1a0] sm:$0xf]
    %v221 = vld [vmem:[#allocation5 + $0x1a4] sm:$0xf]
    %v222 = vld [vmem:[#allocation5 + $0x1a8] sm:$0xf]
    %v223 = vld [vmem:[#allocation5 + $0x1ac] sm:$0xf]
    %v224 = vld [vmem:[#allocation5 + $0x1b0] sm:$0xf]
    %v225 = vld [vmem:[#allocation5 + $0x1b4] sm:$0xf]
    %v226 = vld [vmem:[#allocation5 + $0x1b8] sm:$0xf]
    %v227 = vld [vmem:[#allocation5 + $0x1bc] sm:$0xf]
    %v228 = vld [vmem:[#allocation5 + $0x1c0] sm:$0xf]
    %v229 = vld [vmem:[#allocation5 + $0x1c4] sm:$0xf]
    %v230 = vld [vmem:[#allocation5 + $0x1c8] sm:$0xf]
    %v231 = vld [vmem:[#allocation5 + $0x1cc] sm:$0xf]
    %v232 = vld [vmem:[#allocation5 + $0x1d0] sm:$0xf]
    %v233 = vld [vmem:[#allocation5 + $0x1d4] sm:$0xf]
    %v234 = vld [vmem:[#allocation5 + $0x1d8] sm:$0xf]
    %v235 = vld [vmem:[#allocation5 + $0x1dc] sm:$0xf]
    %v236 = vld [vmem:[#allocation5 + $0x1e0] sm:$0xf]
    %v237 = vld [vmem:[#allocation5 + $0x1e4] sm:$0xf]
    %v238 = vld [vmem:[#allocation5 + $0x1e8] sm:$0xf]
    %v239 = vld [vmem:[#allocation5 + $0x1ec] sm:$0xf]
    %v240 = vld [vmem:[#allocation5 + $0x1f0] sm:$0xf]
    %v241 = vld [vmem:[#allocation5 + $0x1f4] sm:$0xf]
    %v242 = vld [vmem:[#allocation5 + $0x1f8] sm:$0xf]
    %v243 = vld [vmem:[#allocation5 + $0x1fc] sm:$0xf]
    %v244 = vld [vmem:[#allocation5 + $0x200] sm:$0xf]
    %v245 = vld [vmem:[#allocation5 + $0x204] sm:$0xf]
    %v246 = vld [vmem:[#allocation5 + $0x208] sm:$0xf]
    %v247 = vld [vmem:[#allocation5 + $0x20c] sm:$0xf]
    %v248 = vld [vmem:[#allocation5 + $0x210] sm:$0xf]
    %v249 = vld [vmem:[#allocation5 + $0x214] sm:$0xf]
    %v250 = vld [vmem:[#allocation5 + $0x218] sm:$0xf]
    %v251 = vld [vmem:[#allocation5 + $0x21c] sm:$0xf]
    %v252 = vld [vmem:[#allocation5 + $0x220] sm:$0xf]
    %v253 = vld [vmem:[#allocation5 + $0x224] sm:$0xf]
    %v254 = vld [vmem:[#allocation5 + $0x228] sm:$0xf]
    %v255 = vld [vmem:[#allocation5 + $0x22c] sm:$0xf]
    %v256 = vld [vmem:[#allocation5 + $0x230] sm:$0xf]
    %v257 = vld [vmem:[#allocation5 + $0x234] sm:$0xf]
    %v258 = vld [vmem:[#allocation5 + $0x238] sm:$0xf]
    %v259 = vld [vmem:[#allocation5 + $0x23c] sm:$0xf]
    %v260 = vld [vmem:[#allocation5 + $0x240] sm:$0xf]
    %v261 = vld [vmem:[#allocation5 + $0x244] sm:$0xf]
    %v262 = vld [vmem:[#allocation5 + $0x248] sm:$0xf]
    %v263 = vld [vmem:[#allocation5 + $0x24c] sm:$0xf]
    %v264 = vld [vmem:[#allocation5 + $0x250] sm:$0xf]
    %v265 = vld [vmem:[#allocation5 + $0x254] sm:$0xf]
    %v266 = vld [vmem:[#allocation5 + $0x258] sm:$0xf]
    %v267 = vld [vmem:[#allocation5 + $0x25c] sm:$0xf]
    %v268 = vld [vmem:[#allocation5 + $0x260] sm:$0xf]
    %v269 = vld [vmem:[#allocation5 + $0x264] sm:$0xf]
    %v270 = vld [vmem:[#allocation5 + $0x268] sm:$0xf]
    %v271 = vld [vmem:[#allocation5 + $0x26c] sm:$0xf]
    %v272 = vld [vmem:[#allocation5 + $0x270] sm:$0xf]
    %v273 = vld [vmem:[#allocation5 + $0x274] sm:$0xf]
    %v274 = vld [vmem:[#allocation5 + $0x278] sm:$0xf]
    %v275 = vld [vmem:[#allocation5 + $0x27c] sm:$0xf]
    %v276 = vld [vmem:[#allocation5 + $0x280] sm:$0xf]
    %v277 = vld [vmem:[#allocation5 + $0x284] sm:$0xf]
    %v278 = vld [vmem:[#allocation5 + $0x288] sm:$0xf]
    %v279 = vld [vmem:[#allocation5 + $0x28c] sm:$0xf]
    %v280 = vld [vmem:[#allocation5 + $0x290] sm:$0xf]
    %v281 = vld [vmem:[#allocation5 + $0x294] sm:$0xf]
    %v282 = vld [vmem:[#allocation5 + $0x298] sm:$0xf]
    %v283 = vld [vmem:[#allocation5 + $0x29c] sm:$0xf]
    %v284 = vld [vmem:[#allocation5 + $0x2a0] sm:$0xf]
    %v285 = vld [vmem:[#allocation5 + $0x2a4] sm:$0xf]
    %v286 = vld [vmem:[#allocation5 + $0x2a8] sm:$0xf]
    %v287 = vld [vmem:[#allocation5 + $0x2ac] sm:$0xf]
    %v288 = vld [vmem:[#allocation5 + $0x2b0] sm:$0xf]
    %v289 = vld [vmem:[#allocation5 + $0x2b4] sm:$0xf]
    %v290 = vld [vmem:[#allocation5 + $0x2b8] sm:$0xf]
    %v291 = vld [vmem:[#allocation5 + $0x2bc] sm:$0xf]
    %v292 = vld [vmem:[#allocation5 + $0x2c0] sm:$0xf]
    %v293 = vld [vmem:[#allocation5 + $0x2c4] sm:$0xf]
    %v294 = vld [vmem:[#allocation5 + $0x2c8] sm:$0xf]
    %v295 = vld [vmem:[#allocation5 + $0x2cc] sm:$0xf]
    %v296 = vld [vmem:[#allocation5 + $0x2d0] sm:$0xf]
    %v297 = vld [vmem:[#allocation5 + $0x2d4] sm:$0xf]
    %v298 = vld [vmem:[#allocation5 + $0x2d8] sm:$0xf]
    %v299 = vld [vmem:[#allocation5 + $0x2dc] sm:$0xf]
    %v300 = vld [vmem:[#allocation5 + $0x2e0] sm:$0xf]
    %v301 = vld [vmem:[#allocation5 + $0x2e4] sm:$0xf]
    %v302 = vld [vmem:[#allocation5 + $0x2e8] sm:$0xf]
    %v303 = vld [vmem:[#allocation5 + $0x2ec] sm:$0xf]
    %v304 = vld [vmem:[#allocation5 + $0x2f0] sm:$0xf]
    %v305 = vld [vmem:[#allocation5 + $0x2f4] sm:$0xf]
    %v306 = vld [vmem:[#allocation5 + $0x2f8] sm:$0xf]
    %v307 = vld [vmem:[#allocation5 + $0x2fc] sm:$0xf]
    %v308 = vld [vmem:[#allocation5 + $0x300] sm:$0xf]
    %v309 = vld [vmem:[#allocation5 + $0x304] sm:$0xf]
    %v310 = vld [vmem:[#allocation5 + $0x308] sm:$0xf]
    %v311 = vld [vmem:[#allocation5 + $0x30c] sm:$0xf]
    %v312 = vld [vmem:[#allocation5 + $0x310] sm:$0xf]
    %v313 = vld [vmem:[#allocation5 + $0x314] sm:$0xf]
    %v314 = vld [vmem:[#allocation5 + $0x318] sm:$0xf]
    %v315 = vld [vmem:[#allocation5 + $0x31c] sm:$0xf]
    %v316 = vld [vmem:[#allocation5 + $0x320] sm:$0xf]
    %v317 = vld [vmem:[#allocation5 + $0x324] sm:$0xf]
    %v318 = vld [vmem:[#allocation5 + $0x328] sm:$0xf]
    %v319 = vld [vmem:[#allocation5 + $0x32c] sm:$0xf]
    %v320 = vld [vmem:[#allocation5 + $0x330] sm:$0xf]
    %v321 = vld [vmem:[#allocation5 + $0x334] sm:$0xf]
    %v322 = vld [vmem:[#allocation5 + $0x338] sm:$0xf]
    %v323 = vld [vmem:[#allocation5 + $0x33c] sm:$0xf]
    %v324 = vld [vmem:[#allocation5 + $0x340] sm:$0xf]
    %v325 = vld [vmem:[#allocation5 + $0x344] sm:$0xf]
    %v326 = vld [vmem:[#allocation5 + $0x348] sm:$0xf]
    %v327 = vld [vmem:[#allocation5 + $0x34c] sm:$0xf]
    %v328 = vld [vmem:[#allocation5 + $0x350] sm:$0xf]
    %v329 = vld [vmem:[#allocation5 + $0x354] sm:$0xf]
    %v330 = vld [vmem:[#allocation5 + $0x358] sm:$0xf]
    %v331 = vld [vmem:[#allocation5 + $0x35c] sm:$0xf]
    %v332 = vld [vmem:[#allocation5 + $0x360] sm:$0xf]
    %v333 = vld [vmem:[#allocation5 + $0x364] sm:$0xf]
    %v334 = vld [vmem:[#allocation5 + $0x368] sm:$0xf]
    %v335 = vld [vmem:[#allocation5 + $0x36c] sm:$0xf]
    %v336 = vld [vmem:[#allocation5 + $0x370] sm:$0xf]
    %v337 = vld [vmem:[#allocation5 + $0x374] sm:$0xf]
    %v338 = vld [vmem:[#allocation5 + $0x378] sm:$0xf]
    %v339 = vld [vmem:[#allocation5 + $0x37c] sm:$0xf]
    %v340 = vld [vmem:[#allocation5 + $0x380] sm:$0xf]
    %v341 = vld [vmem:[#allocation5 + $0x384] sm:$0xf]
    %v342 = vld [vmem:[#allocation5 + $0x388] sm:$0xf]
    %v343 = vld [vmem:[#allocation5 + $0x38c] sm:$0xf]
    %v344 = vld [vmem:[#allocation5 + $0x390] sm:$0xf]
    %v345 = vld [vmem:[#allocation5 + $0x394] sm:$0xf]
    %v346 = vld [vmem:[#allocation5 + $0x398] sm:$0xf]
    %v347 = vld [vmem:[#allocation5 + $0x39c] sm:$0xf]
    %v348 = vld [vmem:[#allocation5 + $0x3a0] sm:$0xf]
    %v349 = vld [vmem:[#allocation5 + $0x3a4] sm:$0xf]
    %v350 = vld [vmem:[#allocation5 + $0x3a8] sm:$0xf]
    %v351 = vld [vmem:[#allocation5 + $0x3ac] sm:$0xf]
    %v352 = vld [vmem:[#allocation5 + $0x3b0] sm:$0xf]
    %v353 = vld [vmem:[#allocation5 + $0x3b4] sm:$0xf]
    %v354 = vld [vmem:[#allocation5 + $0x3b8] sm:$0xf]
    %v355 = vld [vmem:[#allocation5 + $0x3bc] sm:$0xf]
    %v356 = vld [vmem:[#allocation5 + $0x3c0] sm:$0xf]
    %v357 = vld [vmem:[#allocation5 + $0x3c4] sm:$0xf]
    %v358 = vld [vmem:[#allocation5 + $0x3c8] sm:$0xf]
    %v359 = vld [vmem:[#allocation5 + $0x3cc] sm:$0xf]
    %v360 = vld [vmem:[#allocation5 + $0x3d0] sm:$0xf]
    %v361 = vld [vmem:[#allocation5 + $0x3d4] sm:$0xf]
    %v362 = vld [vmem:[#allocation5 + $0x3d8] sm:$0xf]
    %v363 = vld [vmem:[#allocation5 + $0x3dc] sm:$0xf]
    %v364 = vld [vmem:[#allocation5 + $0x3e0] sm:$0xf]
    %v365 = vld [vmem:[#allocation5 + $0x3e4] sm:$0xf]
    %v366 = vld [vmem:[#allocation5 + $0x3e8] sm:$0xf]
    %v367 = vld [vmem:[#allocation5 + $0x3ec] sm:$0xf]
    %v368 = vld [vmem:[#allocation5 + $0x3f0] sm:$0xf]
    %v369 = vld [vmem:[#allocation5 + $0x3f4] sm:$0xf]
    %v370 = vld [vmem:[#allocation5 + $0x3f8] sm:$0xf]
    %v371 = vld [vmem:[#allocation5 + $0x3fc] sm:$0xf]
    %v372 = vld [vmem:[#allocation5 + $0x400] sm:$0xf]
    %v373 = vld [vmem:[#allocation5 + $0x404] sm:$0xf]
    %v374 = vld [vmem:[#allocation5 + $0x408] sm:$0xf]
    %v375 = vld [vmem:[#allocation5 + $0x40c] sm:$0xf]
    %v376 = vld [vmem:[#allocation5 + $0x410] sm:$0xf]
    %v377 = vld [vmem:[#allocation5 + $0x414] sm:$0xf]
    %v378 = vld [vmem:[#allocation5 + $0x418] sm:$0xf]
    %v379 = vld [vmem:[#allocation5 + $0x41c] sm:$0xf]
    %v380 = vld [vmem:[#allocation5 + $0x420] sm:$0xf]
    %v381 = vld [vmem:[#allocation5 + $0x424] sm:$0xf]
    %v382 = vld [vmem:[#allocation5 + $0x428] sm:$0xf]
    %v383 = vld [vmem:[#allocation5 + $0x42c] sm:$0xf]
    %v384 = vld [vmem:[#allocation5 + $0x430] sm:$0xf]
    %v385 = vld [vmem:[#allocation5 + $0x434] sm:$0xf]
    %v386 = vld [vmem:[#allocation5 + $0x438] sm:$0xf]
    %v387 = vld [vmem:[#allocation5 + $0x43c] sm:$0xf]
    %v388 = vld [vmem:[#allocation5 + $0x440] sm:$0xf]
    %v389 = vld [vmem:[#allocation5 + $0x444] sm:$0xf]
    %v390 = vld [vmem:[#allocation5 + $0x448] sm:$0xf]
    %v391 = vld [vmem:[#allocation5 + $0x44c] sm:$0xf]
    %v392 = vld [vmem:[#allocation5 + $0x450] sm:$0xf]
    %v393 = vld [vmem:[#allocation5 + $0x454] sm:$0xf]
    %v394 = vld [vmem:[#allocation5 + $0x458] sm:$0xf]
    %v395 = vld [vmem:[#allocation5 + $0x45c] sm:$0xf]
    %v396 = vld [vmem:[#allocation5 + $0x460] sm:$0xf]
    %v397 = vld [vmem:[#allocation5 + $0x464] sm:$0xf]
    %v398 = vld [vmem:[#allocation5 + $0x468] sm:$0xf]
    %v399 = vld [vmem:[#allocation5 + $0x46c] sm:$0xf]
    %v400 = vld [vmem:[#allocation5 + $0x470] sm:$0xf]
    %v401 = vld [vmem:[#allocation5 + $0x474] sm:$0xf]
    %v402 = vld [vmem:[#allocation5 + $0x478] sm:$0xf]
    %v403 = vld [vmem:[#allocation5 + $0x47c] sm:$0xf]
    %v404 = vld [vmem:[#allocation5 + $0x480] sm:$0xf]
    %v405 = vld [vmem:[#allocation5 + $0x484] sm:$0xf]
    %v406 = vld [vmem:[#allocation5 + $0x488] sm:$0xf]
    %v407 = vld [vmem:[#allocation5 + $0x48c] sm:$0xf]
    %v408 = vld [vmem:[#allocation5 + $0x490] sm:$0xf]
    %v409 = vld [vmem:[#allocation5 + $0x494] sm:$0xf]
    %v410 = vld [vmem:[#allocation5 + $0x498] sm:$0xf]
    %v411 = vld [vmem:[#allocation5 + $0x49c] sm:$0xf]
    %v412 = vld [vmem:[#allocation5 + $0x4a0] sm:$0xf]
    %v413 = vld [vmem:[#allocation5 + $0x4a4] sm:$0xf]
    %v414 = vld [vmem:[#allocation5 + $0x4a8] sm:$0xf]
    %v415 = vld [vmem:[#allocation5 + $0x4ac] sm:$0xf]
    %v416 = vld [vmem:[#allocation5 + $0x4b0] sm:$0xf]
    %v417 = vld [vmem:[#allocation5 + $0x4b4] sm:$0xf]
    %v418 = vld [vmem:[#allocation5 + $0x4b8] sm:$0xf]
    %v419 = vld [vmem:[#allocation5 + $0x4bc] sm:$0xf]
    %v420 = vld [vmem:[#allocation5 + $0x4c0] sm:$0xf]
    %v421 = vld [vmem:[#allocation5 + $0x4c4] sm:$0xf]
    %v422 = vld [vmem:[#allocation5 + $0x4c8] sm:$0xf]
    %v423 = vld [vmem:[#allocation5 + $0x4cc] sm:$0xf]
    %v424 = vld [vmem:[#allocation5 + $0x4d0] sm:$0xf]
    %v425 = vld [vmem:[#allocation5 + $0x4d4] sm:$0xf]
    %v426 = vld [vmem:[#allocation5 + $0x4d8] sm:$0xf]
    %v427 = vld [vmem:[#allocation5 + $0x4dc] sm:$0xf]
    %v428 = vld [vmem:[#allocation5 + $0x4e0] sm:$0xf]
    %v429 = vld [vmem:[#allocation5 + $0x4e4] sm:$0xf]
    %v430 = vld [vmem:[#allocation5 + $0x4e8] sm:$0xf]
    %v431 = vld [vmem:[#allocation5 + $0x4ec] sm:$0xf]
    %v432 = vld [vmem:[#allocation5 + $0x4f0] sm:$0xf]
    %v433 = vld [vmem:[#allocation5 + $0x4f4] sm:$0xf]
    %v434 = vld [vmem:[#allocation5 + $0x4f8] sm:$0xf]
    %v435 = vld [vmem:[#allocation5 + $0x4fc] sm:$0xf]
    %v436 = vld [vmem:[#allocation5 + $0x500] sm:$0xf]
    %v437 = vld [vmem:[#allocation5 + $0x504] sm:$0xf]
    %v438 = vld [vmem:[#allocation5 + $0x508] sm:$0xf]
    %v439 = vld [vmem:[#allocation5 + $0x50c] sm:$0xf]
    %v440 = vld [vmem:[#allocation5 + $0x510] sm:$0xf]
    %v441 = vld [vmem:[#allocation5 + $0x514] sm:$0xf]
    %v442 = vld [vmem:[#allocation5 + $0x518] sm:$0xf]
    %v443 = vld [vmem:[#allocation5 + $0x51c] sm:$0xf]
    %v444 = vld [vmem:[#allocation5 + $0x520] sm:$0xf]
    %v445 = vld [vmem:[#allocation5 + $0x524] sm:$0xf]
    %v446 = vld [vmem:[#allocation5 + $0x528] sm:$0xf]
    %v447 = vld [vmem:[#allocation5 + $0x52c] sm:$0xf]
    %v448 = vld [vmem:[#allocation5 + $0x530] sm:$0xf]
    %v449 = vld [vmem:[#allocation5 + $0x534] sm:$0xf]
    %v450 = vld [vmem:[#allocation5 + $0x538] sm:$0xf]
    %v451 = vld [vmem:[#allocation5 + $0x53c] sm:$0xf]
    %v452 = vld [vmem:[#allocation5 + $0x540] sm:$0xf]
    %v453 = vld [vmem:[#allocation5 + $0x544] sm:$0xf]
    %v454 = vld [vmem:[#allocation5 + $0x548] sm:$0xf]
    %v455 = vld [vmem:[#allocation5 + $0x54c] sm:$0xf]
    %v456 = vld [vmem:[#allocation5 + $0x550] sm:$0xf]
    %v457 = vld [vmem:[#allocation5 + $0x554] sm:$0xf]
    %v458 = vld [vmem:[#allocation5 + $0x558] sm:$0xf]
    %v459 = vld [vmem:[#allocation5 + $0x55c] sm:$0xf]
    %v460 = vld [vmem:[#allocation5 + $0x560] sm:$0xf]
    %v461 = vld [vmem:[#allocation5 + $0x564] sm:$0xf]
    %v462 = vld [vmem:[#allocation5 + $0x568] sm:$0xf]
    %v463 = vld [vmem:[#allocation5 + $0x56c] sm:$0xf]
    %v464 = vld [vmem:[#allocation5 + $0x570] sm:$0xf]
    %v465 = vld [vmem:[#allocation5 + $0x574] sm:$0xf]
    %v466 = vld [vmem:[#allocation5 + $0x578] sm:$0xf]
    %v467 = vld [vmem:[#allocation5 + $0x57c] sm:$0xf]
    %v468 = vld [vmem:[#allocation5 + $0x580] sm:$0xf]
    %v469 = vld [vmem:[#allocation5 + $0x584] sm:$0xf]
    %v470 = vld [vmem:[#allocation5 + $0x588] sm:$0xf]
    %v471 = vld [vmem:[#allocation5 + $0x58c] sm:$0xf]
    %v472 = vld [vmem:[#allocation5 + $0x590] sm:$0xf]
    %v473 = vld [vmem:[#allocation5 + $0x594] sm:$0xf]
    %v474 = vld [vmem:[#allocation5 + $0x598] sm:$0xf]
    %v475 = vld [vmem:[#allocation5 + $0x59c] sm:$0xf]
    %v476 = vld [vmem:[#allocation5 + $0x5a0] sm:$0xf]
    %v477 = vld [vmem:[#allocation5 + $0x5a4] sm:$0xf]
    %v478 = vld [vmem:[#allocation5 + $0x5a8] sm:$0xf]
    %v479 = vld [vmem:[#allocation5 + $0x5ac] sm:$0xf]
    %v480 = vld [vmem:[#allocation5 + $0x5b0] sm:$0xf]
    %v481 = vld [vmem:[#allocation5 + $0x5b4] sm:$0xf]
    %v482 = vld [vmem:[#allocation5 + $0x5b8] sm:$0xf]
    %v483 = vld [vmem:[#allocation5 + $0x5bc] sm:$0xf]
    %v484 = vld [vmem:[#allocation5 + $0x5c0] sm:$0xf]
    %v485 = vld [vmem:[#allocation5 + $0x5c4] sm:$0xf]
    %v486 = vld [vmem:[#allocation5 + $0x5c8] sm:$0xf]
    %v487 = vld [vmem:[#allocation5 + $0x5cc] sm:$0xf]
    %v488 = vld [vmem:[#allocation5 + $0x5d0] sm:$0xf]
    %v489 = vld [vmem:[#allocation5 + $0x5d4] sm:$0xf]
    %v490 = vld [vmem:[#allocation5 + $0x5d8] sm:$0xf]
    %v491 = vld [vmem:[#allocation5 + $0x5dc] sm:$0xf]
    %v492 = vld [vmem:[#allocation5 + $0x5e0] sm:$0xf]
    %v493 = vld [vmem:[#allocation5 + $0x5e4] sm:$0xf]
    %v494 = vld [vmem:[#allocation5 + $0x5e8] sm:$0xf]
    %v495 = vld [vmem:[#allocation5 + $0x5ec] sm:$0xf]
    %v496 = vld [vmem:[#allocation5 + $0x5f0] sm:$0xf]
    %v497 = vld [vmem:[#allocation5 + $0x5f4] sm:$0xf]
    %v498 = vld [vmem:[#allocation5 + $0x5f8] sm:$0xf]
    %v499 = vld [vmem:[#allocation5 + $0x5fc] sm:$0xf]
    %v500 = vld [vmem:[%s2] sm:$0x1]
    %v502 = vlaneseq
    %v503 = vshrl.u32 %v502, 7
    %v504 = vsub.s32 0, %v503
    %v505 = vrot.slane %v500, %v504
    %v891 = vunpack.c.l.b16 %v116
    %v892 = vunpack.c.l.b16 %v117
    %v893 = vunpack.c.l.b16 %v118
    %v894 = vunpack.c.l.b16 %v119
    %v895 = vunpack.c.l.b16 %v120
    %v896 = vunpack.c.l.b16 %v121
    %v897 = vunpack.c.l.b16 %v122
    %v898 = vunpack.c.l.b16 %v123
    %v899 = vunpack.c.l.b16 %v124
    %v900 = vunpack.c.l.b16 %v125
    %v901 = vunpack.c.l.b16 %v126
    %v902 = vunpack.c.l.b16 %v127
    %v903 = vunpack.c.l.b16 %v128
    %v904 = vunpack.c.l.b16 %v129
    %v905 = vunpack.c.l.b16 %v130
    %v906 = vunpack.c.l.b16 %v131
    %v907 = vunpack.c.l.b16 %v132
    %v908 = vunpack.c.l.b16 %v133
    %v909 = vunpack.c.l.b16 %v134
    %v910 = vunpack.c.l.b16 %v135
    %v911 = vunpack.c.l.b16 %v136
    %v912 = vunpack.c.l.b16 %v137
    %v913 = vunpack.c.l.b16 %v138
    %v914 = vunpack.c.l.b16 %v139
    %v915 = vunpack.c.l.b16 %v140
    %v916 = vunpack.c.l.b16 %v141
    %v917 = vunpack.c.l.b16 %v142
    %v918 = vunpack.c.l.b16 %v143
    %v919 = vunpack.c.l.b16 %v144
    %v920 = vunpack.c.l.b16 %v145
    %v921 = vunpack.c.l.b16 %v146
    %v922 = vunpack.c.l.b16 %v147
    %v923 = vunpack.c.l.b16 %v148
    %v924 = vunpack.c.l.b16 %v149
    %v925 = vunpack.c.l.b16 %v150
    %v926 = vunpack.c.l.b16 %v151
    %v927 = vunpack.c.l.b16 %v152
    %v928 = vunpack.c.l.b16 %v153
    %v929 = vunpack.c.l.b16 %v154
    %v930 = vunpack.c.l.b16 %v155
    %v931 = vunpack.c.l.b16 %v156
    %v932 = vunpack.c.l.b16 %v157
    %v933 = vunpack.c.l.b16 %v158
    %v934 = vunpack.c.l.b16 %v159
    %v935 = vunpack.c.l.b16 %v160
    %v936 = vunpack.c.l.b16 %v161
    %v937 = vunpack.c.l.b16 %v162
    %v938 = vunpack.c.l.b16 %v163
    %v939 = vunpack.c.l.b16 %v164
    %v940 = vunpack.c.l.b16 %v165
    %v941 = vunpack.c.l.b16 %v166
    %v942 = vunpack.c.l.b16 %v167
    %v943 = vunpack.c.l.b16 %v168
    %v944 = vunpack.c.l.b16 %v169
    %v945 = vunpack.c.l.b16 %v170
    %v946 = vunpack.c.l.b16 %v171
    %v947 = vunpack.c.l.b16 %v172
    %v948 = vunpack.c.l.b16 %v173
    %v949 = vunpack.c.l.b16 %v174
    %v950 = vunpack.c.l.b16 %v175
    %v951 = vunpack.c.l.b16 %v176
    %v952 = vunpack.c.l.b16 %v177
    %v953 = vunpack.c.l.b16 %v178
    %v954 = vunpack.c.l.b16 %v179
    %v955 = vunpack.c.l.b16 %v180
    %v956 = vunpack.c.l.b16 %v181
    %v957 = vunpack.c.l.b16 %v182
    %v958 = vunpack.c.l.b16 %v183
    %v959 = vunpack.c.l.b16 %v184
    %v960 = vunpack.c.l.b16 %v185
    %v961 = vunpack.c.l.b16 %v186
    %v962 = vunpack.c.l.b16 %v187
    %v963 = vunpack.c.l.b16 %v188
    %v964 = vunpack.c.l.b16 %v189
    %v965 = vunpack.c.l.b16 %v190
    %v966 = vunpack.c.l.b16 %v191
    %v967 = vunpack.c.l.b16 %v192
    %v968 = vunpack.c.l.b16 %v193
    %v969 = vunpack.c.l.b16 %v194
    %v970 = vunpack.c.l.b16 %v195
    %v971 = vunpack.c.l.b16 %v196
    %v972 = vunpack.c.l.b16 %v197
    %v973 = vunpack.c.l.b16 %v198
    %v974 = vunpack.c.l.b16 %v199
    %v975 = vunpack.c.l.b16 %v200
    %v976 = vunpack.c.l.b16 %v201
    %v977 = vunpack.c.l.b16 %v202
    %v978 = vunpack.c.l.b16 %v203
    %v979 = vunpack.c.l.b16 %v204
    %v980 = vunpack.c.l.b16 %v205
    %v981 = vunpack.c.l.b16 %v206
    %v982 = vunpack.c.l.b16 %v207
    %v983 = vunpack.c.l.b16 %v208
    %v984 = vunpack.c.l.b16 %v209
    %v985 = vunpack.c.l.b16 %v210
    %v986 = vunpack.c.l.b16 %v211
    %v987 = vunpack.c.l.b16 %v212
    %v988 = vunpack.c.l.b16 %v213
    %v989 = vunpack.c.l.b16 %v214
    %v990 = vunpack.c.l.b16 %v215
    %v991 = vunpack.c.l.b16 %v216
    %v992 = vunpack.c.l.b16 %v217
    %v993 = vunpack.c.l.b16 %v218
    %v994 = vunpack.c.l.b16 %v219
    %v995 = vunpack.c.l.b16 %v220
    %v996 = vunpack.c.l.b16 %v221
    %v997 = vunpack.c.l.b16 %v222
    %v998 = vunpack.c.l.b16 %v223
    %v999 = vunpack.c.l.b16 %v224
    %v1000 = vunpack.c.l.b16 %v225
    %v1001 = vunpack.c.l.b16 %v226
    %v1002 = vunpack.c.l.b16 %v227
    %v1003 = vunpack.c.l.b16 %v228
    %v1004 = vunpack.c.l.b16 %v229
    %v1005 = vunpack.c.l.b16 %v230
    %v1006 = vunpack.c.l.b16 %v231
    %v1007 = vunpack.c.l.b16 %v232
    %v1008 = vunpack.c.l.b16 %v233
    %v1009 = vunpack.c.l.b16 %v234
    %v1010 = vunpack.c.l.b16 %v235
    %v1011 = vunpack.c.l.b16 %v236
    %v1012 = vunpack.c.l.b16 %v237
    %v1013 = vunpack.c.l.b16 %v238
    %v1014 = vunpack.c.l.b16 %v239
    %v1015 = vunpack.c.l.b16 %v240
    %v1016 = vunpack.c.l.b16 %v241
    %v1017 = vunpack.c.l.b16 %v242
    %v1018 = vunpack.c.l.b16 %v243
    %v1019 = vunpack.c.l.b16 %v244
    %v1020 = vunpack.c.l.b16 %v245
    %v1021 = vunpack.c.l.b16 %v246
    %v1022 = vunpack.c.l.b16 %v247
    %v1023 = vunpack.c.l.b16 %v248
    %v1024 = vunpack.c.l.b16 %v249
    %v1025 = vunpack.c.l.b16 %v250
    %v1026 = vunpack.c.l.b16 %v251
    %v1027 = vunpack.c.l.b16 %v252
    %v1028 = vunpack.c.l.b16 %v253
    %v1029 = vunpack.c.l.b16 %v254
    %v1030 = vunpack.c.l.b16 %v255
    %v1031 = vunpack.c.l.b16 %v256
    %v1032 = vunpack.c.l.b16 %v257
    %v1033 = vunpack.c.l.b16 %v258
    %v1034 = vunpack.c.l.b16 %v259
    %v1035 = vunpack.c.l.b16 %v260
    %v1036 = vunpack.c.l.b16 %v261
    %v1037 = vunpack.c.l.b16 %v262
    %v1038 = vunpack.c.l.b16 %v263
    %v1039 = vunpack.c.l.b16 %v264
    %v1040 = vunpack.c.l.b16 %v265
    %v1041 = vunpack.c.l.b16 %v266
    %v1042 = vunpack.c.l.b16 %v267
    %v1043 = vunpack.c.l.b16 %v268
    %v1044 = vunpack.c.l.b16 %v269
    %v1045 = vunpack.c.l.b16 %v270
    %v1046 = vunpack.c.l.b16 %v271
    %v1047 = vunpack.c.l.b16 %v272
    %v1048 = vunpack.c.l.b16 %v273
    %v1049 = vunpack.c.l.b16 %v274
    %v1050 = vunpack.c.l.b16 %v275
    %v1051 = vunpack.c.l.b16 %v276
    %v1052 = vunpack.c.l.b16 %v277
    %v1053 = vunpack.c.l.b16 %v278
    %v1054 = vunpack.c.l.b16 %v279
    %v1055 = vunpack.c.l.b16 %v280
    %v1056 = vunpack.c.l.b16 %v281
    %v1057 = vunpack.c.l.b16 %v282
    %v1058 = vunpack.c.l.b16 %v283
    %v1059 = vunpack.c.l.b16 %v284
    %v1060 = vunpack.c.l.b16 %v285
    %v1061 = vunpack.c.l.b16 %v286
    %v1062 = vunpack.c.l.b16 %v287
    %v1063 = vunpack.c.l.b16 %v288
    %v1064 = vunpack.c.l.b16 %v289
    %v1065 = vunpack.c.l.b16 %v290
    %v1066 = vunpack.c.l.b16 %v291
    %v1067 = vunpack.c.l.b16 %v292
    %v1068 = vunpack.c.l.b16 %v293
    %v1069 = vunpack.c.l.b16 %v294
    %v1070 = vunpack.c.l.b16 %v295
    %v1071 = vunpack.c.l.b16 %v296
    %v1072 = vunpack.c.l.b16 %v297
    %v1073 = vunpack.c.l.b16 %v298
    %v1074 = vunpack.c.l.b16 %v299
    %v1075 = vunpack.c.l.b16 %v300
    %v1076 = vunpack.c.l.b16 %v301
    %v1077 = vunpack.c.l.b16 %v302
    %v1078 = vunpack.c.l.b16 %v303
    %v1079 = vunpack.c.l.b16 %v304
    %v1080 = vunpack.c.l.b16 %v305
    %v1081 = vunpack.c.l.b16 %v306
    %v1082 = vunpack.c.l.b16 %v307
    %v1083 = vunpack.c.l.b16 %v308
    %v1084 = vunpack.c.l.b16 %v309
    %v1085 = vunpack.c.l.b16 %v310
    %v1086 = vunpack.c.l.b16 %v311
    %v1087 = vunpack.c.l.b16 %v312
    %v1088 = vunpack.c.l.b16 %v313
    %v1089 = vunpack.c.l.b16 %v314
    %v1090 = vunpack.c.l.b16 %v315
    %v1091 = vunpack.c.l.b16 %v316
    %v1092 = vunpack.c.l.b16 %v317
    %v1093 = vunpack.c.l.b16 %v318
    %v1094 = vunpack.c.l.b16 %v319
    %v1095 = vunpack.c.l.b16 %v320
    %v1096 = vunpack.c.l.b16 %v321
    %v1097 = vunpack.c.l.b16 %v322
    %v1098 = vunpack.c.l.b16 %v323
    %v1099 = vunpack.c.l.b16 %v324
    %v1100 = vunpack.c.l.b16 %v325
    %v1101 = vunpack.c.l.b16 %v326
    %v1102 = vunpack.c.l.b16 %v327
    %v1103 = vunpack.c.l.b16 %v328
    %v1104 = vunpack.c.l.b16 %v329
    %v1105 = vunpack.c.l.b16 %v330
    %v1106 = vunpack.c.l.b16 %v331
    %v1107 = vunpack.c.l.b16 %v332
    %v1108 = vunpack.c.l.b16 %v333
    %v1109 = vunpack.c.l.b16 %v334
    %v1110 = vunpack.c.l.b16 %v335
    %v1111 = vunpack.c.l.b16 %v336
    %v1112 = vunpack.c.l.b16 %v337
    %v1113 = vunpack.c.l.b16 %v338
    %v1114 = vunpack.c.l.b16 %v339
    %v1115 = vunpack.c.l.b16 %v340
    %v1116 = vunpack.c.l.b16 %v341
    %v1117 = vunpack.c.l.b16 %v342
    %v1118 = vunpack.c.l.b16 %v343
    %v1119 = vunpack.c.l.b16 %v344
    %v1120 = vunpack.c.l.b16 %v345
    %v1121 = vunpack.c.l.b16 %v346
    %v1122 = vunpack.c.l.b16 %v347
    %v1123 = vunpack.c.l.b16 %v348
    %v1124 = vunpack.c.l.b16 %v349
    %v1125 = vunpack.c.l.b16 %v350
    %v1126 = vunpack.c.l.b16 %v351
    %v1127 = vunpack.c.l.b16 %v352
    %v1128 = vunpack.c.l.b16 %v353
    %v1129 = vunpack.c.l.b16 %v354
    %v1130 = vunpack.c.l.b16 %v355
    %v1131 = vunpack.c.l.b16 %v356
    %v1132 = vunpack.c.l.b16 %v357
    %v1133 = vunpack.c.l.b16 %v358
    %v1134 = vunpack.c.l.b16 %v359
    %v1135 = vunpack.c.l.b16 %v360
    %v1136 = vunpack.c.l.b16 %v361
    %v1137 = vunpack.c.l.b16 %v362
    %v1138 = vunpack.c.l.b16 %v363
    %v1139 = vunpack.c.l.b16 %v364
    %v1140 = vunpack.c.l.b16 %v365
    %v1141 = vunpack.c.l.b16 %v366
    %v1142 = vunpack.c.l.b16 %v367
    %v1143 = vunpack.c.l.b16 %v368
    %v1144 = vunpack.c.l.b16 %v369
    %v1145 = vunpack.c.l.b16 %v370
    %v1146 = vunpack.c.l.b16 %v371
    %v1147 = vunpack.c.l.b16 %v372
    %v1148 = vunpack.c.l.b16 %v373
    %v1149 = vunpack.c.l.b16 %v374
    %v1150 = vunpack.c.l.b16 %v375
    %v1151 = vunpack.c.l.b16 %v376
    %v1152 = vunpack.c.l.b16 %v377
    %v1153 = vunpack.c.l.b16 %v378
    %v1154 = vunpack.c.l.b16 %v379
    %v1155 = vunpack.c.l.b16 %v380
    %v1156 = vunpack.c.l.b16 %v381
    %v1157 = vunpack.c.l.b16 %v382
    %v1158 = vunpack.c.l.b16 %v383
    %v1159 = vunpack.c.l.b16 %v384
    %v1160 = vunpack.c.l.b16 %v385
    %v1161 = vunpack.c.l.b16 %v386
    %v1162 = vunpack.c.l.b16 %v387
    %v1163 = vunpack.c.l.b16 %v388
    %v1164 = vunpack.c.l.b16 %v389
    %v1165 = vunpack.c.l.b16 %v390
    %v1166 = vunpack.c.l.b16 %v391
    %v1167 = vunpack.c.l.b16 %v392
    %v1168 = vunpack.c.l.b16 %v393
    %v1169 = vunpack.c.l.b16 %v394
    %v1170 = vunpack.c.l.b16 %v395
    %v1171 = vunpack.c.l.b16 %v396
    %v1172 = vunpack.c.l.b16 %v397
    %v1173 = vunpack.c.l.b16 %v398
    %v1174 = vunpack.c.l.b16 %v399
    %v1175 = vunpack.c.l.b16 %v400
    %v1176 = vunpack.c.l.b16 %v401
    %v1177 = vunpack.c.l.b16 %v402
    %v1178 = vunpack.c.l.b16 %v403
    %v1179 = vunpack.c.l.b16 %v404
    %v1180 = vunpack.c.l.b16 %v405
    %v1181 = vunpack.c.l.b16 %v406
    %v1182 = vunpack.c.l.b16 %v407
    %v1183 = vunpack.c.l.b16 %v408
    %v1184 = vunpack.c.l.b16 %v409
    %v1185 = vunpack.c.l.b16 %v410
    %v1186 = vunpack.c.l.b16 %v411
    %v1187 = vunpack.c.l.b16 %v412
    %v1188 = vunpack.c.l.b16 %v413
    %v1189 = vunpack.c.l.b16 %v414
    %v1190 = vunpack.c.l.b16 %v415
    %v1191 = vunpack.c.l.b16 %v416
    %v1192 = vunpack.c.l.b16 %v417
    %v1193 = vunpack.c.l.b16 %v418
    %v1194 = vunpack.c.l.b16 %v419
    %v1195 = vunpack.c.l.b16 %v420
    %v1196 = vunpack.c.l.b16 %v421
    %v1197 = vunpack.c.l.b16 %v422
    %v1198 = vunpack.c.l.b16 %v423
    %v1199 = vunpack.c.l.b16 %v424
    %v1200 = vunpack.c.l.b16 %v425
    %v1201 = vunpack.c.l.b16 %v426
    %v1202 = vunpack.c.l.b16 %v427
    %v1203 = vunpack.c.l.b16 %v428
    %v1204 = vunpack.c.l.b16 %v429
    %v1205 = vunpack.c.l.b16 %v430
    %v1206 = vunpack.c.l.b16 %v431
    %v1207 = vunpack.c.l.b16 %v432
    %v1208 = vunpack.c.l.b16 %v433
    %v1209 = vunpack.c.l.b16 %v434
    %v1210 = vunpack.c.l.b16 %v435
    %v1211 = vunpack.c.l.b16 %v436
    %v1212 = vunpack.c.l.b16 %v437
    %v1213 = vunpack.c.l.b16 %v438
    %v1214 = vunpack.c.l.b16 %v439
    %v1215 = vunpack.c.l.b16 %v440
    %v1216 = vunpack.c.l.b16 %v441
    %v1217 = vunpack.c.l.b16 %v442
    %v1218 = vunpack.c.l.b16 %v443
    %v1219 = vunpack.c.l.b16 %v444
    %v1220 = vunpack.c.l.b16 %v445
    %v1221 = vunpack.c.l.b16 %v446
    %v1222 = vunpack.c.l.b16 %v447
    %v1223 = vunpack.c.l.b16 %v448
    %v1224 = vunpack.c.l.b16 %v449
    %v1225 = vunpack.c.l.b16 %v450
    %v1226 = vunpack.c.l.b16 %v451
    %v1227 = vunpack.c.l.b16 %v452
    %v1228 = vunpack.c.l.b16 %v453
    %v1229 = vunpack.c.l.b16 %v454
    %v1230 = vunpack.c.l.b16 %v455
    %v1231 = vunpack.c.l.b16 %v456
    %v1232 = vunpack.c.l.b16 %v457
    %v1233 = vunpack.c.l.b16 %v458
    %v1234 = vunpack.c.l.b16 %v459
    %v1235 = vunpack.c.l.b16 %v460
    %v1236 = vunpack.c.l.b16 %v461
    %v1237 = vunpack.c.l.b16 %v462
    %v1238 = vunpack.c.l.b16 %v463
    %v1239 = vunpack.c.l.b16 %v464
    %v1240 = vunpack.c.l.b16 %v465
    %v1241 = vunpack.c.l.b16 %v466
    %v1242 = vunpack.c.l.b16 %v467
    %v1243 = vunpack.c.l.b16 %v468
    %v1244 = vunpack.c.l.b16 %v469
    %v1245 = vunpack.c.l.b16 %v470
    %v1246 = vunpack.c.l.b16 %v471
    %v1247 = vunpack.c.l.b16 %v472
    %v1248 = vunpack.c.l.b16 %v473
    %v1249 = vunpack.c.l.b16 %v474
    %v1250 = vunpack.c.l.b16 %v475
    %v1251 = vunpack.c.l.b16 %v476
    %v1252 = vunpack.c.l.b16 %v477
    %v1253 = vunpack.c.l.b16 %v478
    %v1254 = vunpack.c.l.b16 %v479
    %v1255 = vunpack.c.l.b16 %v480
    %v1256 = vunpack.c.l.b16 %v481
    %v1257 = vunpack.c.l.b16 %v482
    %v1258 = vunpack.c.l.b16 %v483
    %v1259 = vunpack.c.l.b16 %v484
    %v1260 = vunpack.c.l.b16 %v485
    %v1261 = vunpack.c.l.b16 %v486
    %v1262 = vunpack.c.l.b16 %v487
    %v1263 = vunpack.c.l.b16 %v488
    %v1264 = vunpack.c.l.b16 %v489
    %v1265 = vunpack.c.l.b16 %v490
    %v1266 = vunpack.c.l.b16 %v491
    %v1267 = vunpack.c.l.b16 %v492
    %v1268 = vunpack.c.l.b16 %v493
    %v1269 = vunpack.c.l.b16 %v494
    %v1270 = vunpack.c.l.b16 %v495
    %v1271 = vunpack.c.l.b16 %v496
    %v1272 = vunpack.c.l.b16 %v497
    %v1273 = vunpack.c.l.b16 %v498
    %v1274 = vunpack.c.l.b16 %v499
    %v1275 = vpack.c.b16 %v892, %v891
    %v1276 = vpack.c.b16 %v894, %v893
    %v1277 = vpack.c.b16 %v896, %v895
    %v1278 = vpack.c.b16 %v898, %v897
    %v1279 = vpack.c.b16 %v900, %v899
    %v1280 = vpack.c.b16 %v902, %v901
    %v1281 = vpack.c.b16 %v904, %v903
    %v1282 = vpack.c.b16 %v906, %v905
    %v1283 = vpack.c.b16 %v908, %v907
    %v1284 = vpack.c.b16 %v910, %v909
    %v1285 = vpack.c.b16 %v912, %v911
    %v1286 = vpack.c.b16 %v914, %v913
    %v1287 = vpack.c.b16 %v916, %v915
    %v1288 = vpack.c.b16 %v918, %v917
    %v1289 = vpack.c.b16 %v920, %v919
    %v1290 = vpack.c.b16 %v922, %v921
    %v1291 = vpack.c.b16 %v924, %v923
    %v1292 = vpack.c.b16 %v926, %v925
    %v1293 = vpack.c.b16 %v928, %v927
    %v1294 = vpack.c.b16 %v930, %v929
    %v1295 = vpack.c.b16 %v932, %v931
    %v1296 = vpack.c.b16 %v934, %v933
    %v1297 = vpack.c.b16 %v936, %v935
    %v1298 = vpack.c.b16 %v938, %v937
    %v1299 = vpack.c.b16 %v940, %v939
    %v1300 = vpack.c.b16 %v942, %v941
    %v1301 = vpack.c.b16 %v944, %v943
    %v1302 = vpack.c.b16 %v946, %v945
    %v1303 = vpack.c.b16 %v948, %v947
    %v1304 = vpack.c.b16 %v950, %v949
    %v1305 = vpack.c.b16 %v952, %v951
    %v1306 = vpack.c.b16 %v954, %v953
    %v1307 = vpack.c.b16 %v956, %v955
    %v1308 = vpack.c.b16 %v958, %v957
    %v1309 = vpack.c.b16 %v960, %v959
    %v1310 = vpack.c.b16 %v962, %v961
    %v1311 = vpack.c.b16 %v964, %v963
    %v1312 = vpack.c.b16 %v966, %v965
    %v1313 = vpack.c.b16 %v968, %v967
    %v1314 = vpack.c.b16 %v970, %v969
    %v1315 = vpack.c.b16 %v972, %v971
    %v1316 = vpack.c.b16 %v974, %v973
    %v1317 = vpack.c.b16 %v976, %v975
    %v1318 = vpack.c.b16 %v978, %v977
    %v1319 = vpack.c.b16 %v980, %v979
    %v1320 = vpack.c.b16 %v982, %v981
    %v1321 = vpack.c.b16 %v984, %v983
    %v1322 = vpack.c.b16 %v986, %v985
    %v1323 = vpack.c.b16 %v988, %v987
    %v1324 = vpack.c.b16 %v990, %v989
    %v1325 = vpack.c.b16 %v992, %v991
    %v1326 = vpack.c.b16 %v994, %v993
    %v1327 = vpack.c.b16 %v996, %v995
    %v1328 = vpack.c.b16 %v998, %v997
    %v1329 = vpack.c.b16 %v1000, %v999
    %v1330 = vpack.c.b16 %v1002, %v1001
    %v1331 = vpack.c.b16 %v1004, %v1003
    %v1332 = vpack.c.b16 %v1006, %v1005
    %v1333 = vpack.c.b16 %v1008, %v1007
    %v1334 = vpack.c.b16 %v1010, %v1009
    %v1335 = vpack.c.b16 %v1012, %v1011
    %v1336 = vpack.c.b16 %v1014, %v1013
    %v1337 = vpack.c.b16 %v1016, %v1015
    %v1338 = vpack.c.b16 %v1018, %v1017
    %v1339 = vpack.c.b16 %v1020, %v1019
    %v1340 = vpack.c.b16 %v1022, %v1021
    %v1341 = vpack.c.b16 %v1024, %v1023
    %v1342 = vpack.c.b16 %v1026, %v1025
    %v1343 = vpack.c.b16 %v1028, %v1027
    %v1344 = vpack.c.b16 %v1030, %v1029
    %v1345 = vpack.c.b16 %v1032, %v1031
    %v1346 = vpack.c.b16 %v1034, %v1033
    %v1347 = vpack.c.b16 %v1036, %v1035
    %v1348 = vpack.c.b16 %v1038, %v1037
    %v1349 = vpack.c.b16 %v1040, %v1039
    %v1350 = vpack.c.b16 %v1042, %v1041
    %v1351 = vpack.c.b16 %v1044, %v1043
    %v1352 = vpack.c.b16 %v1046, %v1045
    %v1353 = vpack.c.b16 %v1048, %v1047
    %v1354 = vpack.c.b16 %v1050, %v1049
    %v1355 = vpack.c.b16 %v1052, %v1051
    %v1356 = vpack.c.b16 %v1054, %v1053
    %v1357 = vpack.c.b16 %v1056, %v1055
    %v1358 = vpack.c.b16 %v1058, %v1057
    %v1359 = vpack.c.b16 %v1060, %v1059
    %v1360 = vpack.c.b16 %v1062, %v1061
    %v1361 = vpack.c.b16 %v1064, %v1063
    %v1362 = vpack.c.b16 %v1066, %v1065
    %v1363 = vpack.c.b16 %v1068, %v1067
    %v1364 = vpack.c.b16 %v1070, %v1069
    %v1365 = vpack.c.b16 %v1072, %v1071
    %v1366 = vpack.c.b16 %v1074, %v1073
    %v1367 = vpack.c.b16 %v1076, %v1075
    %v1368 = vpack.c.b16 %v1078, %v1077
    %v1369 = vpack.c.b16 %v1080, %v1079
    %v1370 = vpack.c.b16 %v1082, %v1081
    %v1371 = vpack.c.b16 %v1084, %v1083
    %v1372 = vpack.c.b16 %v1086, %v1085
    %v1373 = vpack.c.b16 %v1088, %v1087
    %v1374 = vpack.c.b16 %v1090, %v1089
    %v1375 = vpack.c.b16 %v1092, %v1091
    %v1376 = vpack.c.b16 %v1094, %v1093
    %v1377 = vpack.c.b16 %v1096, %v1095
    %v1378 = vpack.c.b16 %v1098, %v1097
    %v1379 = vpack.c.b16 %v1100, %v1099
    %v1380 = vpack.c.b16 %v1102, %v1101
    %v1381 = vpack.c.b16 %v1104, %v1103
    %v1382 = vpack.c.b16 %v1106, %v1105
    %v1383 = vpack.c.b16 %v1108, %v1107
    %v1384 = vpack.c.b16 %v1110, %v1109
    %v1385 = vpack.c.b16 %v1112, %v1111
    %v1386 = vpack.c.b16 %v1114, %v1113
    %v1387 = vpack.c.b16 %v1116, %v1115
    %v1388 = vpack.c.b16 %v1118, %v1117
    %v1389 = vpack.c.b16 %v1120, %v1119
    %v1390 = vpack.c.b16 %v1122, %v1121
    %v1391 = vpack.c.b16 %v1124, %v1123
    %v1392 = vpack.c.b16 %v1126, %v1125
    %v1393 = vpack.c.b16 %v1128, %v1127
    %v1394 = vpack.c.b16 %v1130, %v1129
    %v1395 = vpack.c.b16 %v1132, %v1131
    %v1396 = vpack.c.b16 %v1134, %v1133
    %v1397 = vpack.c.b16 %v1136, %v1135
    %v1398 = vpack.c.b16 %v1138, %v1137
    %v1399 = vpack.c.b16 %v1140, %v1139
    %v1400 = vpack.c.b16 %v1142, %v1141
    %v1401 = vpack.c.b16 %v1144, %v1143
    %v1402 = vpack.c.b16 %v1146, %v1145
    %v1403 = vpack.c.b16 %v1148, %v1147
    %v1404 = vpack.c.b16 %v1150, %v1149
    %v1405 = vpack.c.b16 %v1152, %v1151
    %v1406 = vpack.c.b16 %v1154, %v1153
    %v1407 = vpack.c.b16 %v1156, %v1155
    %v1408 = vpack.c.b16 %v1158, %v1157
    %v1409 = vpack.c.b16 %v1160, %v1159
    %v1410 = vpack.c.b16 %v1162, %v1161
    %v1411 = vpack.c.b16 %v1164, %v1163
    %v1412 = vpack.c.b16 %v1166, %v1165
    %v1413 = vpack.c.b16 %v1168, %v1167
    %v1414 = vpack.c.b16 %v1170, %v1169
    %v1415 = vpack.c.b16 %v1172, %v1171
    %v1416 = vpack.c.b16 %v1174, %v1173
    %v1417 = vpack.c.b16 %v1176, %v1175
    %v1418 = vpack.c.b16 %v1178, %v1177
    %v1419 = vpack.c.b16 %v1180, %v1179
    %v1420 = vpack.c.b16 %v1182, %v1181
    %v1421 = vpack.c.b16 %v1184, %v1183
    %v1422 = vpack.c.b16 %v1186, %v1185
    %v1423 = vpack.c.b16 %v1188, %v1187
    %v1424 = vpack.c.b16 %v1190, %v1189
    %v1425 = vpack.c.b16 %v1192, %v1191
    %v1426 = vpack.c.b16 %v1194, %v1193
    %v1427 = vpack.c.b16 %v1196, %v1195
    %v1428 = vpack.c.b16 %v1198, %v1197
    %v1429 = vpack.c.b16 %v1200, %v1199
    %v1430 = vpack.c.b16 %v1202, %v1201
    %v1431 = vpack.c.b16 %v1204, %v1203
    %v1432 = vpack.c.b16 %v1206, %v1205
    %v1433 = vpack.c.b16 %v1208, %v1207
    %v1434 = vpack.c.b16 %v1210, %v1209
    %v1435 = vpack.c.b16 %v1212, %v1211
    %v1436 = vpack.c.b16 %v1214, %v1213
    %v1437 = vpack.c.b16 %v1216, %v1215
    %v1438 = vpack.c.b16 %v1218, %v1217
    %v1439 = vpack.c.b16 %v1220, %v1219
    %v1440 = vpack.c.b16 %v1222, %v1221
    %v1441 = vpack.c.b16 %v1224, %v1223
    %v1442 = vpack.c.b16 %v1226, %v1225
    %v1443 = vpack.c.b16 %v1228, %v1227
    %v1444 = vpack.c.b16 %v1230, %v1229
    %v1445 = vpack.c.b16 %v1232, %v1231
    %v1446 = vpack.c.b16 %v1234, %v1233
    %v1447 = vpack.c.b16 %v1236, %v1235
    %v1448 = vpack.c.b16 %v1238, %v1237
    %v1449 = vpack.c.b16 %v1240, %v1239
    %v1450 = vpack.c.b16 %v1242, %v1241
    %v1451 = vpack.c.b16 %v1244, %v1243
    %v1452 = vpack.c.b16 %v1246, %v1245
    %v1453 = vpack.c.b16 %v1248, %v1247
    %v1454 = vpack.c.b16 %v1250, %v1249
    %v1455 = vpack.c.b16 %v1252, %v1251
    %v1456 = vpack.c.b16 %v1254, %v1253
    %v1457 = vpack.c.b16 %v1256, %v1255
    %v1458 = vpack.c.b16 %v1258, %v1257
    %v1459 = vpack.c.b16 %v1260, %v1259
    %v1460 = vpack.c.b16 %v1262, %v1261
    %v1461 = vpack.c.b16 %v1264, %v1263
    %v1462 = vpack.c.b16 %v1266, %v1265
    %v1463 = vpack.c.b16 %v1268, %v1267
    %v1464 = vpack.c.b16 %v1270, %v1269
    %v1465 = vpack.c.b16 %v1272, %v1271
    %v1466 = vpack.c.b16 %v1274, %v1273
    %1659 = vmatprep.subr.bf16.mxu0 0
    %1660 = vmatpush1.bf16.msra.mxu0 %v1275
    %1661 = vmatprep.subr.bf16.mxu0 0
    %1662 = vmatpush1.bf16.msra.mxu0 %v1276
    %1663 = vmatprep.subr.bf16.mxu0 0
    %1664 = vmatpush1.bf16.msra.mxu0 %v1277
    %1665 = vmatprep.subr.bf16.mxu0 0
    %1666 = vmatpush1.bf16.msra.mxu0 %v1278
    %1667 = vmatprep.subr.bf16.mxu0 0
    %1668 = vmatpush1.bf16.msra.mxu0 %v1279
    %1669 = vmatprep.subr.bf16.mxu0 0
    %1670 = vmatpush1.bf16.msra.mxu0 %v1280
    %1671 = vmatprep.subr.bf16.mxu0 0
    %1672 = vmatpush1.bf16.msra.mxu0 %v1281
    %1673 = vmatprep.subr.bf16.mxu0 0
    %1674 = vmatpush1.bf16.msra.mxu0 %v1282
    %1675 = vmatprep.subr.bf16.mxu0 0
    %1676 = vmatpush1.bf16.msra.mxu0 %v1283
    %1677 = vmatprep.subr.bf16.mxu0 0
    %1678 = vmatpush1.bf16.msra.mxu0 %v1284
    %1679 = vmatprep.subr.bf16.mxu0 0
    %1680 = vmatpush1.bf16.msra.mxu0 %v1285
    %1681 = vmatprep.subr.bf16.mxu0 0
    %1682 = vmatpush1.bf16.msra.mxu0 %v1286
    %1683 = vmatprep.subr.bf16.mxu0 0
    %1684 = vmatpush1.bf16.msra.mxu0 %v1287
    %1685 = vmatprep.subr.bf16.mxu0 0
    %1686 = vmatpush1.bf16.msra.mxu0 %v1288
    %1687 = vmatprep.subr.bf16.mxu0 0
    %1688 = vmatpush1.bf16.msra.mxu0 %v1289
    %1689 = vmatprep.subr.bf16.mxu0 0
    %1690 = vmatpush1.bf16.msra.mxu0 %v1290
    %1691 = vmatprep.mubr.bf16.mxu0 %v93
    %1692 = vmatmul.mubr.bf16.gmra.mrb[0].mxu0 %v92
    %v1693 = vpop.f32.mrb[0].mxu0
    %v1694 = vadd.f32 %v505, %v1693
    %v1695 = vpop.f32.mrb[0].mxu0
    %v1696 = vpop.f32.mrb[0].mxu0
    %v1697 = vadd.f32 %v505, %v1696
    %v1698 = vpop.f32.mrb[0].mxu0
    %1699 = vdwg.mxu0
    %1700 = vmatprep.subr.bf16.mxu0 0
    %1701 = vmatpush1.bf16.msra.mxu0 %v1291
    %1702 = vmatprep.subr.bf16.mxu0 0
    %1703 = vmatpush1.bf16.msra.mxu0 %v1292
    %1704 = vmatprep.subr.bf16.mxu0 0
    %1705 = vmatpush1.bf16.msra.mxu0 %v1293
    %1706 = vmatprep.subr.bf16.mxu0 0
    %1707 = vmatpush1.bf16.msra.mxu0 %v1294
    %1708 = vmatprep.subr.bf16.mxu0 0
    %1709 = vmatpush1.bf16.msra.mxu0 %v1295
    %1710 = vmatprep.subr.bf16.mxu0 0
    %1711 = vmatpush1.bf16.msra.mxu0 %v1296
    %1712 = vmatprep.subr.bf16.mxu0 0
    %1713 = vmatpush1.bf16.msra.mxu0 %v1297
    %1714 = vmatprep.subr.bf16.mxu0 0
    %1715 = vmatpush1.bf16.msra.mxu0 %v1298
    %1716 = vmatprep.subr.bf16.mxu0 0
    %1717 = vmatpush1.bf16.msra.mxu0 %v1299
    %1718 = vmatprep.subr.bf16.mxu0 0
    %1719 = vmatpush1.bf16.msra.mxu0 %v1300
    %1720 = vmatprep.subr.bf16.mxu0 0
    %1721 = vmatpush1.bf16.msra.mxu0 %v1301
    %1722 = vmatprep.subr.bf16.mxu0 0
    %1723 = vmatpush1.bf16.msra.mxu0 %v1302
    %1724 = vmatprep.subr.bf16.mxu0 0
    %1725 = vmatpush1.bf16.msra.mxu0 %v1303
    %1726 = vmatprep.subr.bf16.mxu0 0
    %1727 = vmatpush1.bf16.msra.mxu0 %v1304
    %1728 = vmatprep.subr.bf16.mxu0 0
    %1729 = vmatpush1.bf16.msra.mxu0 %v1305
    %1730 = vmatprep.subr.bf16.mxu0 0
    %1731 = vmatpush1.bf16.msra.mxu0 %v1306
    %1732 = vmatprep.mubr.bf16.mxu0 %v95
    %1733 = vmatmul.mubr.bf16.gmra.mrb[0].mxu0 %v94
    %v1734 = vpop.f32.mrb[0].mxu0
    %v1735 = vadd.f32 %v1694, %v1734
    %v1736 = vpop.f32.mrb[0].mxu0
    %v1737 = vpop.f32.mrb[0].mxu0
    %v1738 = vadd.f32 %v1697, %v1737
    %v1739 = vpop.f32.mrb[0].mxu0
    %1740 = vdwg.mxu0
    %1741 = vmatprep.subr.bf16.mxu0 0
    %1742 = vmatpush1.bf16.msra.mxu0 %v1307
    %1743 = vmatprep.subr.bf16.mxu0 0
    %1744 = vmatpush1.bf16.msra.mxu0 %v1308
    %1745 = vmatprep.subr.bf16.mxu0 0
    %1746 = vmatpush1.bf16.msra.mxu0 %v1309
    %1747 = vmatprep.subr.bf16.mxu0 0
    %1748 = vmatpush1.bf16.msra.mxu0 %v1310
    %1749 = vmatprep.subr.bf16.mxu0 0
    %1750 = vmatpush1.bf16.msra.mxu0 %v1311
    %1751 = vmatprep.subr.bf16.mxu0 0
    %1752 = vmatpush1.bf16.msra.mxu0 %v1312
    %1753 = vmatprep.subr.bf16.mxu0 0
    %1754 = vmatpush1.bf16.msra.mxu0 %v1313
    %1755 = vmatprep.subr.bf16.mxu0 0
    %1756 = vmatpush1.bf16.msra.mxu0 %v1314
    %1757 = vmatprep.subr.bf16.mxu0 0
    %1758 = vmatpush1.bf16.msra.mxu0 %v1315
    %1759 = vmatprep.subr.bf16.mxu0 0
    %1760 = vmatpush1.bf16.msra.mxu0 %v1316
    %1761 = vmatprep.subr.bf16.mxu0 0
    %1762 = vmatpush1.bf16.msra.mxu0 %v1317
    %1763 = vmatprep.subr.bf16.mxu0 0
    %1764 = vmatpush1.bf16.msra.mxu0 %v1318
    %1765 = vmatprep.subr.bf16.mxu0 0
    %1766 = vmatpush1.bf16.msra.mxu0 %v1319
    %1767 = vmatprep.subr.bf16.mxu0 0
    %1768 = vmatpush1.bf16.msra.mxu0 %v1320
    %1769 = vmatprep.subr.bf16.mxu0 0
    %1770 = vmatpush1.bf16.msra.mxu0 %v1321
    %1771 = vmatprep.subr.bf16.mxu0 0
    %1772 = vmatpush1.bf16.msra.mxu0 %v1322
    %1773 = vmatprep.mubr.bf16.mxu0 %v97
    %1774 = vmatmul.mubr.bf16.gmra.mrb[0].mxu0 %v96
    %v1775 = vpop.f32.mrb[0].mxu0
    %v1776 = vadd.f32 %v1735, %v1775
    %v1777 = vpop.f32.mrb[0].mxu0
    %v1778 = vpop.f32.mrb[0].mxu0
    %v1779 = vadd.f32 %v1738, %v1778
    %v1780 = vpop.f32.mrb[0].mxu0
    %1781 = vdwg.mxu0
    %1782 = vmatprep.subr.bf16.mxu0 0
    %1783 = vmatpush1.bf16.msra.mxu0 %v1323
    %1784 = vmatprep.subr.bf16.mxu0 0
    %1785 = vmatpush1.bf16.msra.mxu0 %v1324
    %1786 = vmatprep.subr.bf16.mxu0 0
    %1787 = vmatpush1.bf16.msra.mxu0 %v1325
    %1788 = vmatprep.subr.bf16.mxu0 0
    %1789 = vmatpush1.bf16.msra.mxu0 %v1326
    %1790 = vmatprep.subr.bf16.mxu0 0
    %1791 = vmatpush1.bf16.msra.mxu0 %v1327
    %1792 = vmatprep.subr.bf16.mxu0 0
    %1793 = vmatpush1.bf16.msra.mxu0 %v1328
    %1794 = vmatprep.subr.bf16.mxu0 0
    %1795 = vmatpush1.bf16.msra.mxu0 %v1329
    %1796 = vmatprep.subr.bf16.mxu0 0
    %1797 = vmatpush1.bf16.msra.mxu0 %v1330
    %1798 = vmatprep.subr.bf16.mxu0 0
    %1799 = vmatpush1.bf16.msra.mxu0 %v1331
    %1800 = vmatprep.subr.bf16.mxu0 0
    %1801 = vmatpush1.bf16.msra.mxu0 %v1332
    %1802 = vmatprep.subr.bf16.mxu0 0
    %1803 = vmatpush1.bf16.msra.mxu0 %v1333
    %1804 = vmatprep.subr.bf16.mxu0 0
    %1805 = vmatpush1.bf16.msra.mxu0 %v1334
    %1806 = vmatprep.subr.bf16.mxu0 0
    %1807 = vmatpush1.bf16.msra.mxu0 %v1335
    %1808 = vmatprep.subr.bf16.mxu0 0
    %1809 = vmatpush1.bf16.msra.mxu0 %v1336
    %1810 = vmatprep.subr.bf16.mxu0 0
    %1811 = vmatpush1.bf16.msra.mxu0 %v1337
    %1812 = vmatprep.subr.bf16.mxu0 0
    %1813 = vmatpush1.bf16.msra.mxu0 %v1338
    %1814 = vmatprep.mubr.bf16.mxu0 %v99
    %1815 = vmatmul.mubr.bf16.gmra.mrb[0].mxu0 %v98
    %v1816 = vpop.f32.mrb[0].mxu0
    %v1817 = vadd.f32 %v1776, %v1816
    %v1818 = vpop.f32.mrb[0].mxu0
    %v1819 = vpop.f32.mrb[0].mxu0
    %v1820 = vadd.f32 %v1779, %v1819
    %v1821 = vpop.f32.mrb[0].mxu0
    %1822 = vdwg.mxu0
    %1823 = vmatprep.subr.bf16.mxu0 0
    %1824 = vmatpush1.bf16.msra.mxu0 %v1339
    %1825 = vmatprep.subr.bf16.mxu0 0
    %1826 = vmatpush1.bf16.msra.mxu0 %v1340
    %1827 = vmatprep.subr.bf16.mxu0 0
    %1828 = vmatpush1.bf16.msra.mxu0 %v1341
    %1829 = vmatprep.subr.bf16.mxu0 0
    %1830 = vmatpush1.bf16.msra.mxu0 %v1342
    %1831 = vmatprep.subr.bf16.mxu0 0
    %1832 = vmatpush1.bf16.msra.mxu0 %v1343
    %1833 = vmatprep.subr.bf16.mxu0 0
    %1834 = vmatpush1.bf16.msra.mxu0 %v1344
    %1835 = vmatprep.subr.bf16.mxu0 0
    %1836 = vmatpush1.bf16.msra.mxu0 %v1345
    %1837 = vmatprep.subr.bf16.mxu0 0
    %1838 = vmatpush1.bf16.msra.mxu0 %v1346
    %1839 = vmatprep.subr.bf16.mxu0 0
    %1840 = vmatpush1.bf16.msra.mxu0 %v1347
    %1841 = vmatprep.subr.bf16.mxu0 0
    %1842 = vmatpush1.bf16.msra.mxu0 %v1348
    %1843 = vmatprep.subr.bf16.mxu0 0
    %1844 = vmatpush1.bf16.msra.mxu0 %v1349
    %1845 = vmatprep.subr.bf16.mxu0 0
    %1846 = vmatpush1.bf16.msra.mxu0 %v1350
    %1847 = vmatprep.subr.bf16.mxu0 0
    %1848 = vmatpush1.bf16.msra.mxu0 %v1351
    %1849 = vmatprep.subr.bf16.mxu0 0
    %1850 = vmatpush1.bf16.msra.mxu0 %v1352
    %1851 = vmatprep.subr.bf16.mxu0 0
    %1852 = vmatpush1.bf16.msra.mxu0 %v1353
    %1853 = vmatprep.subr.bf16.mxu0 0
    %1854 = vmatpush1.bf16.msra.mxu0 %v1354
    %1855 = vmatprep.mubr.bf16.mxu0 %v101
    %1856 = vmatmul.mubr.bf16.gmra.mrb[0].mxu0 %v100
    %v1857 = vpop.f32.mrb[0].mxu0
    %v1858 = vadd.f32 %v1817, %v1857
    %v1859 = vpop.f32.mrb[0].mxu0
    %v1860 = vpop.f32.mrb[0].mxu0
    %v1861 = vadd.f32 %v1820, %v1860
    %v1862 = vpop.f32.mrb[0].mxu0
    %1863 = vdwg.mxu0
    %1864 = vmatprep.subr.bf16.mxu0 0
    %1865 = vmatpush1.bf16.msra.mxu0 %v1355
    %1866 = vmatprep.subr.bf16.mxu0 0
    %1867 = vmatpush1.bf16.msra.mxu0 %v1356
    %1868 = vmatprep.subr.bf16.mxu0 0
    %1869 = vmatpush1.bf16.msra.mxu0 %v1357
    %1870 = vmatprep.subr.bf16.mxu0 0
    %1871 = vmatpush1.bf16.msra.mxu0 %v1358
    %1872 = vmatprep.subr.bf16.mxu0 0
    %1873 = vmatpush1.bf16.msra.mxu0 %v1359
    %1874 = vmatprep.subr.bf16.mxu0 0
    %1875 = vmatpush1.bf16.msra.mxu0 %v1360
    %1876 = vmatprep.subr.bf16.mxu0 0
    %1877 = vmatpush1.bf16.msra.mxu0 %v1361
    %1878 = vmatprep.subr.bf16.mxu0 0
    %1879 = vmatpush1.bf16.msra.mxu0 %v1362
    %1880 = vmatprep.subr.bf16.mxu0 0
    %1881 = vmatpush1.bf16.msra.mxu0 %v1363
    %1882 = vmatprep.subr.bf16.mxu0 0
    %1883 = vmatpush1.bf16.msra.mxu0 %v1364
    %1884 = vmatprep.subr.bf16.mxu0 0
    %1885 = vmatpush1.bf16.msra.mxu0 %v1365
    %1886 = vmatprep.subr.bf16.mxu0 0
    %1887 = vmatpush1.bf16.msra.mxu0 %v1366
    %1888 = vmatprep.subr.bf16.mxu0 0
    %1889 = vmatpush1.bf16.msra.mxu0 %v1367
    %1890 = vmatprep.subr.bf16.mxu0 0
    %1891 = vmatpush1.bf16.msra.mxu0 %v1368
    %1892 = vmatprep.subr.bf16.mxu0 0
    %1893 = vmatpush1.bf16.msra.mxu0 %v1369
    %1894 = vmatprep.subr.bf16.mxu0 0
    %1895 = vmatpush1.bf16.msra.mxu0 %v1370
    %1896 = vmatprep.mubr.bf16.mxu0 %v103
    %1897 = vmatmul.mubr.bf16.gmra.mrb[0].mxu0 %v102
    %v1898 = vpop.f32.mrb[0].mxu0
    %v1899 = vadd.f32 %v1858, %v1898
    %v1900 = vpop.f32.mrb[0].mxu0
    %v1901 = vpop.f32.mrb[0].mxu0
    %v1902 = vadd.f32 %v1861, %v1901
    %v1903 = vpop.f32.mrb[0].mxu0
    %1904 = vdwg.mxu0
    %1905 = vmatprep.subr.bf16.mxu0 0
    %1906 = vmatpush1.bf16.msra.mxu0 %v1371
    %1907 = vmatprep.subr.bf16.mxu0 0
    %1908 = vmatpush1.bf16.msra.mxu0 %v1372
    %1909 = vmatprep.subr.bf16.mxu0 0
    %1910 = vmatpush1.bf16.msra.mxu0 %v1373
    %1911 = vmatprep.subr.bf16.mxu0 0
    %1912 = vmatpush1.bf16.msra.mxu0 %v1374
    %1913 = vmatprep.subr.bf16.mxu0 0
    %1914 = vmatpush1.bf16.msra.mxu0 %v1375
    %1915 = vmatprep.subr.bf16.mxu0 0
    %1916 = vmatpush1.bf16.msra.mxu0 %v1376
    %1917 = vmatprep.subr.bf16.mxu0 0
    %1918 = vmatpush1.bf16.msra.mxu0 %v1377
    %1919 = vmatprep.subr.bf16.mxu0 0
    %1920 = vmatpush1.bf16.msra.mxu0 %v1378
    %1921 = vmatprep.subr.bf16.mxu0 0
    %1922 = vmatpush1.bf16.msra.mxu0 %v1379
    %1923 = vmatprep.subr.bf16.mxu0 0
    %1924 = vmatpush1.bf16.msra.mxu0 %v1380
    %1925 = vmatprep.subr.bf16.mxu0 0
    %1926 = vmatpush1.bf16.msra.mxu0 %v1381
    %1927 = vmatprep.subr.bf16.mxu0 0
    %1928 = vmatpush1.bf16.msra.mxu0 %v1382
    %1929 = vmatprep.subr.bf16.mxu0 0
    %1930 = vmatpush1.bf16.msra.mxu0 %v1383
    %1931 = vmatprep.subr.bf16.mxu0 0
    %1932 = vmatpush1.bf16.msra.mxu0 %v1384
    %1933 = vmatprep.subr.bf16.mxu0 0
    %1934 = vmatpush1.bf16.msra.mxu0 %v1385
    %1935 = vmatprep.subr.bf16.mxu0 0
    %1936 = vmatpush1.bf16.msra.mxu0 %v1386
    %1937 = vmatprep.mubr.bf16.mxu0 %v105
    %1938 = vmatmul.mubr.bf16.gmra.mrb[0].mxu0 %v104
    %v1939 = vpop.f32.mrb[0].mxu0
    %v1940 = vadd.f32 %v1899, %v1939
    %v1941 = vpop.f32.mrb[0].mxu0
    %v1942 = vpop.f32.mrb[0].mxu0
    %v1943 = vadd.f32 %v1902, %v1942
    %v1944 = vpop.f32.mrb[0].mxu0
    %1945 = vdwg.mxu0
    %1946 = vmatprep.subr.bf16.mxu0 0
    %1947 = vmatpush1.bf16.msra.mxu0 %v1387
    %1948 = vmatprep.subr.bf16.mxu0 0
    %1949 = vmatpush1.bf16.msra.mxu0 %v1388
    %1950 = vmatprep.subr.bf16.mxu0 0
    %1951 = vmatpush1.bf16.msra.mxu0 %v1389
    %1952 = vmatprep.subr.bf16.mxu0 0
    %1953 = vmatpush1.bf16.msra.mxu0 %v1390
    %1954 = vmatprep.subr.bf16.mxu0 0
    %1955 = vmatpush1.bf16.msra.mxu0 %v1391
    %1956 = vmatprep.subr.bf16.mxu0 0
    %1957 = vmatpush1.bf16.msra.mxu0 %v1392
    %1958 = vmatprep.subr.bf16.mxu0 0
    %1959 = vmatpush1.bf16.msra.mxu0 %v1393
    %1960 = vmatprep.subr.bf16.mxu0 0
    %1961 = vmatpush1.bf16.msra.mxu0 %v1394
    %1962 = vmatprep.subr.bf16.mxu0 0
    %1963 = vmatpush1.bf16.msra.mxu0 %v1395
    %1964 = vmatprep.subr.bf16.mxu0 0
    %1965 = vmatpush1.bf16.msra.mxu0 %v1396
    %1966 = vmatprep.subr.bf16.mxu0 0
    %1967 = vmatpush1.bf16.msra.mxu0 %v1397
    %1968 = vmatprep.subr.bf16.mxu0 0
    %1969 = vmatpush1.bf16.msra.mxu0 %v1398
    %1970 = vmatprep.subr.bf16.mxu0 0
    %1971 = vmatpush1.bf16.msra.mxu0 %v1399
    %1972 = vmatprep.subr.bf16.mxu0 0
    %1973 = vmatpush1.bf16.msra.mxu0 %v1400
    %1974 = vmatprep.subr.bf16.mxu0 0
    %1975 = vmatpush1.bf16.msra.mxu0 %v1401
    %1976 = vmatprep.subr.bf16.mxu0 0
    %1977 = vmatpush1.bf16.msra.mxu0 %v1402
    %1978 = vmatprep.mubr.bf16.mxu0 %v107
    %1979 = vmatmul.mubr.bf16.gmra.mrb[0].mxu0 %v106
    %v1980 = vpop.f32.mrb[0].mxu0
    %v1981 = vadd.f32 %v1940, %v1980
    %v1982 = vpop.f32.mrb[0].mxu0
    %v1983 = vpop.f32.mrb[0].mxu0
    %v1984 = vadd.f32 %v1943, %v1983
    %v1985 = vpop.f32.mrb[0].mxu0
    %1986 = vdwg.mxu0
    %1987 = vmatprep.subr.bf16.mxu0 0
    %1988 = vmatpush1.bf16.msra.mxu0 %v1403
    %1989 = vmatprep.subr.bf16.mxu0 0
    %1990 = vmatpush1.bf16.msra.mxu0 %v1404
    %1991 = vmatprep.subr.bf16.mxu0 0
    %1992 = vmatpush1.bf16.msra.mxu0 %v1405
    %1993 = vmatprep.subr.bf16.mxu0 0
    %1994 = vmatpush1.bf16.msra.mxu0 %v1406
    %1995 = vmatprep.subr.bf16.mxu0 0
    %1996 = vmatpush1.bf16.msra.mxu0 %v1407
    %1997 = vmatprep.subr.bf16.mxu0 0
    %1998 = vmatpush1.bf16.msra.mxu0 %v1408
    %1999 = vmatprep.subr.bf16.mxu0 0
    %2000 = vmatpush1.bf16.msra.mxu0 %v1409
    %2001 = vmatprep.subr.bf16.mxu0 0
    %2002 = vmatpush1.bf16.msra.mxu0 %v1410
    %2003 = vmatprep.subr.bf16.mxu0 0
    %2004 = vmatpush1.bf16.msra.mxu0 %v1411
    %2005 = vmatprep.subr.bf16.mxu0 0
    %2006 = vmatpush1.bf16.msra.mxu0 %v1412
    %2007 = vmatprep.subr.bf16.mxu0 0
    %2008 = vmatpush1.bf16.msra.mxu0 %v1413
    %2009 = vmatprep.subr.bf16.mxu0 0
    %2010 = vmatpush1.bf16.msra.mxu0 %v1414
    %2011 = vmatprep.subr.bf16.mxu0 0
    %2012 = vmatpush1.bf16.msra.mxu0 %v1415
    %2013 = vmatprep.subr.bf16.mxu0 0
    %2014 = vmatpush1.bf16.msra.mxu0 %v1416
    %2015 = vmatprep.subr.bf16.mxu0 0
    %2016 = vmatpush1.bf16.msra.mxu0 %v1417
    %2017 = vmatprep.subr.bf16.mxu0 0
    %2018 = vmatpush1.bf16.msra.mxu0 %v1418
    %2019 = vmatprep.mubr.bf16.mxu0 %v109
    %2020 = vmatmul.mubr.bf16.gmra.mrb[0].mxu0 %v108
    %v2021 = vpop.f32.mrb[0].mxu0
    %v2022 = vadd.f32 %v1981, %v2021
    %v2023 = vpop.f32.mrb[0].mxu0
    %v2024 = vpop.f32.mrb[0].mxu0
    %v2025 = vadd.f32 %v1984, %v2024
    %v2026 = vpop.f32.mrb[0].mxu0
    %2027 = vdwg.mxu0
    %2028 = vmatprep.subr.bf16.mxu0 0
    %2029 = vmatpush1.bf16.msra.mxu0 %v1419
    %2030 = vmatprep.subr.bf16.mxu0 0
    %2031 = vmatpush1.bf16.msra.mxu0 %v1420
    %2032 = vmatprep.subr.bf16.mxu0 0
    %2033 = vmatpush1.bf16.msra.mxu0 %v1421
    %2034 = vmatprep.subr.bf16.mxu0 0
    %2035 = vmatpush1.bf16.msra.mxu0 %v1422
    %2036 = vmatprep.subr.bf16.mxu0 0
    %2037 = vmatpush1.bf16.msra.mxu0 %v1423
    %2038 = vmatprep.subr.bf16.mxu0 0
    %2039 = vmatpush1.bf16.msra.mxu0 %v1424
    %2040 = vmatprep.subr.bf16.mxu0 0
    %2041 = vmatpush1.bf16.msra.mxu0 %v1425
    %2042 = vmatprep.subr.bf16.mxu0 0
    %2043 = vmatpush1.bf16.msra.mxu0 %v1426
    %2044 = vmatprep.subr.bf16.mxu0 0
    %2045 = vmatpush1.bf16.msra.mxu0 %v1427
    %2046 = vmatprep.subr.bf16.mxu0 0
    %2047 = vmatpush1.bf16.msra.mxu0 %v1428
    %2048 = vmatprep.subr.bf16.mxu0 0
    %2049 = vmatpush1.bf16.msra.mxu0 %v1429
    %2050 = vmatprep.subr.bf16.mxu0 0
    %2051 = vmatpush1.bf16.msra.mxu0 %v1430
    %2052 = vmatprep.subr.bf16.mxu0 0
    %2053 = vmatpush1.bf16.msra.mxu0 %v1431
    %2054 = vmatprep.subr.bf16.mxu0 0
    %2055 = vmatpush1.bf16.msra.mxu0 %v1432
    %2056 = vmatprep.subr.bf16.mxu0 0
    %2057 = vmatpush1.bf16.msra.mxu0 %v1433
    %2058 = vmatprep.subr.bf16.mxu0 0
    %2059 = vmatpush1.bf16.msra.mxu0 %v1434
    %2060 = vmatprep.mubr.bf16.mxu0 %v111
    %2061 = vmatmul.mubr.bf16.gmra.mrb[0].mxu0 %v110
    %v2062 = vpop.f32.mrb[0].mxu0
    %v2063 = vadd.f32 %v2022, %v2062
    %v2064 = vpop.f32.mrb[0].mxu0
    %v2065 = vpop.f32.mrb[0].mxu0
    %v2066 = vadd.f32 %v2025, %v2065
    %v2067 = vpop.f32.mrb[0].mxu0
    %2068 = vdwg.mxu0
    %2069 = vmatprep.subr.bf16.mxu0 0
    %2070 = vmatpush1.bf16.msra.mxu0 %v1435
    %2071 = vmatprep.subr.bf16.mxu0 0
    %2072 = vmatpush1.bf16.msra.mxu0 %v1436
    %2073 = vmatprep.subr.bf16.mxu0 0
    %2074 = vmatpush1.bf16.msra.mxu0 %v1437
    %2075 = vmatprep.subr.bf16.mxu0 0
    %2076 = vmatpush1.bf16.msra.mxu0 %v1438
    %2077 = vmatprep.subr.bf16.mxu0 0
    %2078 = vmatpush1.bf16.msra.mxu0 %v1439
    %2079 = vmatprep.subr.bf16.mxu0 0
    %2080 = vmatpush1.bf16.msra.mxu0 %v1440
    %2081 = vmatprep.subr.bf16.mxu0 0
    %2082 = vmatpush1.bf16.msra.mxu0 %v1441
    %2083 = vmatprep.subr.bf16.mxu0 0
    %2084 = vmatpush1.bf16.msra.mxu0 %v1442
    %2085 = vmatprep.subr.bf16.mxu0 0
    %2086 = vmatpush1.bf16.msra.mxu0 %v1443
    %2087 = vmatprep.subr.bf16.mxu0 0
    %2088 = vmatpush1.bf16.msra.mxu0 %v1444
    %2089 = vmatprep.subr.bf16.mxu0 0
    %2090 = vmatpush1.bf16.msra.mxu0 %v1445
    %2091 = vmatprep.subr.bf16.mxu0 0
    %2092 = vmatpush1.bf16.msra.mxu0 %v1446
    %2093 = vmatprep.subr.bf16.mxu0 0
    %2094 = vmatpush1.bf16.msra.mxu0 %v1447
    %2095 = vmatprep.subr.bf16.mxu0 0
    %2096 = vmatpush1.bf16.msra.mxu0 %v1448
    %2097 = vmatprep.subr.bf16.mxu0 0
    %2098 = vmatpush1.bf16.msra.mxu0 %v1449
    %2099 = vmatprep.subr.bf16.mxu0 0
    %2100 = vmatpush1.bf16.msra.mxu0 %v1450
    %2101 = vmatprep.mubr.bf16.mxu0 %v113
    %2102 = vmatmul.mubr.bf16.gmra.mrb[0].mxu0 %v112
    %v2103 = vpop.f32.mrb[0].mxu0
    %v2104 = vadd.f32 %v2063, %v2103
    %v2105 = vpop.f32.mrb[0].mxu0
    %v2106 = vpop.f32.mrb[0].mxu0
    %v2107 = vadd.f32 %v2066, %v2106
    %v2108 = vpop.f32.mrb[0].mxu0
    %2109 = vdwg.mxu0
    %2110 = vmatprep.subr.bf16.mxu0 0
    %2111 = vmatpush1.bf16.msra.mxu0 %v1451
    %2112 = vmatprep.subr.bf16.mxu0 0
    %2113 = vmatpush1.bf16.msra.mxu0 %v1452
    %2114 = vmatprep.subr.bf16.mxu0 0
    %2115 = vmatpush1.bf16.msra.mxu0 %v1453
    %2116 = vmatprep.subr.bf16.mxu0 0
    %2117 = vmatpush1.bf16.msra.mxu0 %v1454
    %2118 = vmatprep.subr.bf16.mxu0 0
    %2119 = vmatpush1.bf16.msra.mxu0 %v1455
    %2120 = vmatprep.subr.bf16.mxu0 0
    %2121 = vmatpush1.bf16.msra.mxu0 %v1456
    %2122 = vmatprep.subr.bf16.mxu0 0
    %2123 = vmatpush1.bf16.msra.mxu0 %v1457
    %2124 = vmatprep.subr.bf16.mxu0 0
    %2125 = vmatpush1.bf16.msra.mxu0 %v1458
    %2126 = vmatprep.subr.bf16.mxu0 0
    %2127 = vmatpush1.bf16.msra.mxu0 %v1459
    %2128 = vmatprep.subr.bf16.mxu0 0
    %2129 = vmatpush1.bf16.msra.mxu0 %v1460
    %2130 = vmatprep.subr.bf16.mxu0 0
    %2131 = vmatpush1.bf16.msra.mxu0 %v1461
    %2132 = vmatprep.subr.bf16.mxu0 0
    %2133 = vmatpush1.bf16.msra.mxu0 %v1462
    %2134 = vmatprep.subr.bf16.mxu0 0
    %2135 = vmatpush1.bf16.msra.mxu0 %v1463
    %2136 = vmatprep.subr.bf16.mxu0 0
    %2137 = vmatpush1.bf16.msra.mxu0 %v1464
    %2138 = vmatprep.subr.bf16.mxu0 0
    %2139 = vmatpush1.bf16.msra.mxu0 %v1465
    %2140 = vmatprep.subr.bf16.mxu0 0
    %2141 = vmatpush1.bf16.msra.mxu0 %v1466
    %2142 = vmatprep.mubr.bf16.mxu0 %v115
    %2143 = vmatmul.mubr.bf16.gmra.mrb[0].mxu0 %v114
    %v2144 = vpop.f32.mrb[0].mxu0
    %v2145 = vadd.f32 %v2104, %v2144
    %v2146 = vpop.f32.mrb[0].mxu0
    %v2147 = vpop.f32.mrb[0].mxu0
    %v2148 = vadd.f32 %v2107, %v2147
    %v2149 = vpop.f32.mrb[0].mxu0
    %2150 = vdwg.mxu0
    %2151 = vst [vmem:[#allocation7] sm:$0xff] %v2145
    %2152 = vst [vmem:[#allocation7 + $0x8] sm:$0xff] %v2148
    // Predicated region
    $region22: #{tpu_custom_call.1} parent=1 // pred_check
      _
    $region23: #{tpu_custom_call.1} parent=1 // pred_check_branch
      %2154 = sbr.rel (0) target = $region25
    $region24: #{tpu_custom_call.1} parent=1 // pred_region
      %s2156 = ssub.s32 256, 256
      %2157 = vsyncadd [#allocation4], %s2156
      %s2158 = sshll.u32 [#allocation7], 4
      %s2159 = int_to_ptr.vmem [resolvable:$true] %s2158
      %2164 = dma.vmem_to_hbm [thread:$0]  %s2159, 256, %s3, [#allocation4], 128, 128, 8
    $region25: #{tpu_custom_call.1} parent=1 // pred_fallthru
      _
    // Predicated region
    $region26: #{tpu_custom_call.1} parent=1 // pred_check
      _
    $region27: #{tpu_custom_call.1} parent=1 // pred_check_branch
      %2166 = sbr.rel (0) target = $region29
    $region28: #{tpu_custom_call.1} parent=1 // pred_region
      %2167 = dma.done [#allocation4], 256
    $region29: #{tpu_custom_call.1} parent=1 // pred_fallthru
      _
    %2168 = vsyncpa [#allocation3], 1
    %2169 = vsyncpa [#allocation6], 1
    %2170 = vsyncpa [#allocation4], 1

</llo_original>
